<compile_context>
chip_gen: v7x
topology: tpu7x:2x2x1
jax: 0.10.0
libtpu: 0.0.40
codegen_flags: <defaults>
</compile_context>

<pallas_src>
import jax
import jax.numpy as jnp
from jax.experimental import pallas as pl
from jax.experimental.pallas import tpu as pltpu


def _mlp_kernel(x_ref, w1_ref, b_ref, w2_ref, w3_ref, o_ref):
    # fc1 + relu : bf16 x bf16 -> f32 accumulation on the MXU
    h = jnp.dot(x_ref[...], w1_ref[...], preferred_element_type=jnp.float32)
    h = jnp.maximum(h + b_ref[0:1, :], 0.0)

    # fc2 + relu
    h = jnp.dot(h.astype(jnp.bfloat16), w2_ref[...],
                preferred_element_type=jnp.float32)
    h = jnp.maximum(h + b_ref[1:2, :], 0.0)

    # out (N=1): (1,H) x (tm,H)^T contraction on the MXU -> lane-dense (1, tm)
    # row (unmasked store), b3 broadcast from the fused bias block.
    o = jnp.einsum("oh,mh->om", w3_ref[...], h,
                   preferred_element_type=jnp.float32)
    o_ref[...] = (o + b_ref[2:3, 0:1]).astype(o_ref.dtype)


def model_forward(x_feat, params):
    """x_feat: [B, 3*d_model] (f32 or bf16); params: packed weights (init_params)."""
    w1 = params["w1_bf16"]      # [F, H] bf16
    w2 = params["w2_bf16"]      # [H, H] bf16
    b_all = params["b_all"]     # [3, H] f32  (rows: b1, b2, b3-broadcast)
    w3_row = params["w3_row"]   # [1, H] f32  (transposed out-layer weight)

    # Producer-side cast (no-op if the CNN epilogue already emits bf16).
    x_feat = x_feat.astype(jnp.bfloat16)

    B, F = x_feat.shape
    H = w1.shape[1]

    # Batch tile: multiple of 8 sublanes, capped at 512 rows per grid step
    # (>= 256 fills the v6e/v7x MXU; a single-step grid for small batches).
    tm = min(512, 8 * ((B + 7) // 8))
    n_tiles = (B + tm - 1) // tm
    B_pad = tm * n_tiles
    if B_pad != B:
        x_feat = jnp.pad(x_feat, ((0, B_pad - B), (0, 0)))

    out = pl.pallas_call(
        _mlp_kernel,
        out_shape=jax.ShapeDtypeStruct((n_tiles, tm), jnp.float32),
        grid_spec=pltpu.PrefetchScalarGridSpec(
            num_scalar_prefetch=0,
            grid=(n_tiles,),
            in_specs=[
                pl.BlockSpec((tm, F), lambda i: (i, 0)),   # x tile (per grid step)
                pl.BlockSpec((F, H), lambda i: (0, 0)),    # w1, VMEM-resident
                pl.BlockSpec((3, H), lambda i: (0, 0)),    # fused b1/b2/b3 block
                pl.BlockSpec((H, H), lambda i: (0, 0)),    # w2, VMEM-resident
                pl.BlockSpec((1, H), lambda i: (0, 0)),    # w3 as a lane row
            ],
            out_specs=pl.BlockSpec((1, tm), lambda i: (i, 0)),  # lane-dense row
        ),
        compiler_params=pltpu.CompilerParams(
            dimension_semantics=("parallel",),
        ),
    )(x_feat, w1, b_all, w2, w3_row)

    # (n_tiles, tm) rows are row-major == batch order; padded rows are at the
    # very end, so the slice drops exactly the padding.
    return out.reshape(-1, 1)[:B]


def init_params(key, d_model=256):
    """nn.Linear-style init U(-1/sqrt(fan_in), 1/sqrt(fan_in)), packed for the kernel."""
    def linear(k, fan_in, fan_out):
        kw, kb = jax.random.split(k)
        bound = 1.0 / jnp.sqrt(fan_in)
        w = jax.random.uniform(kw, (fan_in, fan_out), jnp.float32, -bound, bound)
        b = jax.random.uniform(kb, (1, fan_out), jnp.float32, -bound, bound)
        return w, b

    k1, k2, k3 = jax.random.split(key, 3)
    F, H = 3 * d_model, 2 * d_model
    w1, b1 = linear(k1, F, H)   # fc1
    w2, b2 = linear(k2, H, H)   # fc2
    w3, b3 = linear(k3, H, 1)   # out

    b_all = jnp.concatenate([b1, b2, jnp.broadcast_to(b3, (1, H))], axis=0)

    return {
        # f32 masters (for the reference / debugging)
        "w1": w1, "b1": b1, "w2": w2, "b2": b2, "w3": w3, "b3": b3,
        # kernel-packed versions
        "w1_bf16": w1.astype(jnp.bfloat16),
        "w2_bf16": w2.astype(jnp.bfloat16),
        "b_all": b_all,                    # (3, H)
        "w3_row": jnp.transpose(w3),       # (1, H)
    }


def reference_forward_bf16(x_feat, p):
    """Mimics the kernel math (bf16 activations/weights, f32 accumulation)."""
    x = x_feat.astype(jnp.bfloat16)
    h = jnp.dot(x, p["w1_bf16"], preferred_element_type=jnp.float32) + p["b1"]
    h = jnp.maximum(h, 0.0)
    h = jnp.dot(h.astype(jnp.bfloat16), p["w2_bf16"],
                preferred_element_type=jnp.float32) + p["b2"]
    h = jnp.maximum(h, 0.0)
    return h @ p["w3"] + p["b3"]


def reference_forward_f32(x_feat, p):
    """Full-precision reference (f32 master weights)."""
    h = jnp.maximum(x_feat @ p["w1"] + p["b1"], 0.0)
    h = jnp.maximum(h @ p["w2"] + p["b2"], 0.0)
    return h @ p["w3"] + p["b3"]


if __name__ == "__main__":
    d_model = 256
    batch = 2

    key = jax.random.PRNGKey(0)
    k_params, k_x = jax.random.split(key)

    params = init_params(k_params, d_model)
    # Flattened CNN features: [B, 3*d_model]; the producer emits bf16.
    x_feat_f32 = jax.random.normal(k_x, (batch, 3 * d_model), jnp.float32)
    x_feat = x_feat_f32.astype(jnp.bfloat16)

    out = model_forward(x_feat, params)
    out = jax.block_until_ready(out)
    assert out.shape == (batch, 1), out.shape

    # Tight check vs a reference using the same bf16 inputs / f32 accumulation.
    ref_bf16 = reference_forward_bf16(x_feat, params)
    assert jnp.allclose(out, ref_bf16, atol=2e-3, rtol=2e-3), "mismatch vs bf16 reference"

    # Loose check vs the f32 master weights (bf16 quantization error only).
    ref_f32 = reference_forward_f32(x_feat_f32, params)
    assert jnp.allclose(out, ref_f32, atol=5e-2, rtol=5e-2), "mismatch vs f32 reference"

    print("KERNEL_OK")
</pallas_src>

<mosaic_0001>
module attributes {stable_mosaic.version = 11 : i64} {
  func.func @_mlp_kernel(%arg0: i32, %arg1: memref<8x768xbf16, #tpu.memory_space<vmem>>, %arg2: memref<768x512xbf16, #tpu.memory_space<vmem>>, %arg3: memref<3x512xf32, #tpu.memory_space<vmem>>, %arg4: memref<512x512xbf16, #tpu.memory_space<vmem>>, %arg5: memref<1x512xf32, #tpu.memory_space<vmem>>, %arg6: memref<1x8xf32, #tpu.memory_space<vmem>>) attributes {dimension_semantics = [#tpu.dimension_semantics<parallel>], iteration_bounds = array<i64: 1>, scalar_prefetch = 0 : i64, scratch_operands = 0 : i64, tpu.core_type = #tpu.core_type<tc>, window_params = [{transform_indices = @transform_0, window_bounds = array<i64: 8, 768>}, {pipeline_mode = #tpu.pipeline_mode<synchronous>, transform_indices = @transform_1, window_bounds = array<i64: 768, 512>}, {pipeline_mode = #tpu.pipeline_mode<synchronous>, transform_indices = @transform_2, window_bounds = array<i64: 3, 512>}, {pipeline_mode = #tpu.pipeline_mode<synchronous>, transform_indices = @transform_3, window_bounds = array<i64: 512, 512>}, {pipeline_mode = #tpu.pipeline_mode<synchronous>, transform_indices = @transform_4, window_bounds = array<i64: 1, 512>}, {transform_indices = @transform_5, window_bounds = array<i64: 1, 8>}]} {
    %c0 = arith.constant 0 : index
    %c0_0 = arith.constant 0 : index
    %0 = vector.load %arg1[%c0, %c0_0] : memref<8x768xbf16, #tpu.memory_space<vmem>>, vector<8x768xbf16>
    %c0_1 = arith.constant 0 : index
    %c0_2 = arith.constant 0 : index
    %1 = vector.load %arg2[%c0_1, %c0_2] : memref<768x512xbf16, #tpu.memory_space<vmem>>, vector<768x512xbf16>
    %cst = arith.constant dense<0.000000e+00> : vector<8x512xf32>
    %2 = tpu.matmul %0, %1, %cst {dimension_numbers = #tpu.dot_dimension_numbers<[1], [0], [0], [1], [0, 0, 1, 1], [], []>} : vector<8x768xbf16>, vector<768x512xbf16>, vector<8x512xf32> -> vector<8x512xf32>
    %c0_3 = arith.constant 0 : index
    %c0_4 = arith.constant 0 : index
    %3 = vector.load %arg3[%c0_3, %c0_4] : memref<3x512xf32, #tpu.memory_space<vmem>>, vector<1x512xf32>
    %4 = vector.broadcast %3 : vector<1x512xf32> to vector<8x512xf32>
    %5 = arith.addf %2, %4 : vector<8x512xf32>
    %cst_5 = arith.constant 0.000000e+00 : f32
    %6 = vector.broadcast %cst_5 : f32 to vector<8x512xf32>
    %7 = arith.maximumf %5, %6 : vector<8x512xf32>
    %8 = arith.truncf %7 : vector<8x512xf32> to vector<8x512xbf16>
    %c0_6 = arith.constant 0 : index
    %c0_7 = arith.constant 0 : index
    %9 = vector.load %arg4[%c0_6, %c0_7] : memref<512x512xbf16, #tpu.memory_space<vmem>>, vector<512x512xbf16>
    %cst_8 = arith.constant dense<0.000000e+00> : vector<8x512xf32>
    %10 = tpu.matmul %8, %9, %cst_8 {dimension_numbers = #tpu.dot_dimension_numbers<[1], [0], [0], [1], [0, 0, 1, 1], [], []>} : vector<8x512xbf16>, vector<512x512xbf16>, vector<8x512xf32> -> vector<8x512xf32>
    %c1 = arith.constant 1 : index
    %c0_9 = arith.constant 0 : index
    %11 = vector.load %arg3[%c1, %c0_9] : memref<3x512xf32, #tpu.memory_space<vmem>>, vector<1x512xf32>
    %12 = vector.broadcast %11 : vector<1x512xf32> to vector<8x512xf32>
    %13 = arith.addf %10, %12 : vector<8x512xf32>
    %cst_10 = arith.constant 0.000000e+00 : f32
    %14 = vector.broadcast %cst_10 : f32 to vector<8x512xf32>
    %15 = arith.maximumf %13, %14 : vector<8x512xf32>
    %c0_11 = arith.constant 0 : index
    %c0_12 = arith.constant 0 : index
    %16 = vector.load %arg5[%c0_11, %c0_12] : memref<1x512xf32, #tpu.memory_space<vmem>>, vector<1x512xf32>
    "tpu.trace_start"() <{level = 10 : i32, message = "oh,mh->om"}> : () -> ()
    %cst_13 = arith.constant dense<0.000000e+00> : vector<1x8xf32>
    %17 = tpu.matmul %16, %15, %cst_13 {dimension_numbers = #tpu.dot_dimension_numbers<[1], [1], [0], [0], [0, 0, 1, 0], [], []>} : vector<1x512xf32>, vector<8x512xf32>, vector<1x8xf32> -> vector<1x8xf32>
    "tpu.trace_stop"() : () -> ()
    %c2 = arith.constant 2 : index
    %c0_14 = arith.constant 0 : index
    %18 = vector.load %arg3[%c2, %c0_14] : memref<3x512xf32, #tpu.memory_space<vmem>>, vector<1x1xf32>
    %19 = vector.broadcast %18 : vector<1x1xf32> to vector<1x8xf32>
    %20 = arith.addf %17, %19 : vector<1x8xf32>
    %c0_15 = arith.constant 0 : index
    %c0_16 = arith.constant 0 : index
    %21 = vector.load %arg6[%c0_15, %c0_16] : memref<1x8xf32, #tpu.memory_space<vmem>>, vector<1x8xf32>
    tpu.vector_store %arg6[%c0_15, %c0_16], %20 {strides = array<i32>} : memref<1x8xf32, #tpu.memory_space<vmem>>, vector<1x8xf32>,
    return
  }
  func.func @transform_0(%arg0: i32) -> (i32, i32) {
    %c0_i32 = arith.constant 0 : i32
    %c0_i32_0 = arith.constant 0 : i32
    return %arg0, %c0_i32 : i32, i32
  }
  func.func @transform_1(%arg0: i32) -> (i32, i32) {
    %c0_i32 = arith.constant 0 : i32
    %c0_i32_0 = arith.constant 0 : i32
    %c0_i32_1 = arith.constant 0 : i32
    return %c0_i32, %c0_i32_0 : i32, i32
  }
  func.func @transform_2(%arg0: i32) -> (i32, i32) {
    %c0_i32 = arith.constant 0 : i32
    %c0_i32_0 = arith.constant 0 : i32
    %c0_i32_1 = arith.constant 0 : i32
    return %c0_i32, %c0_i32_0 : i32, i32
  }
  func.func @transform_3(%arg0: i32) -> (i32, i32) {
    %c0_i32 = arith.constant 0 : i32
    %c0_i32_0 = arith.constant 0 : i32
    %c0_i32_1 = arith.constant 0 : i32
    return %c0_i32, %c0_i32_0 : i32, i32
  }
  func.func @transform_4(%arg0: i32) -> (i32, i32) {
    %c0_i32 = arith.constant 0 : i32
    %c0_i32_0 = arith.constant 0 : i32
    %c0_i32_1 = arith.constant 0 : i32
    return %c0_i32, %c0_i32_0 : i32, i32
  }
  func.func @transform_5(%arg0: i32) -> (i32, i32) {
    %c0_i32 = arith.constant 0 : i32
    %c0_i32_0 = arith.constant 0 : i32
    return %arg0, %c0_i32 : i32, i32
  }
}

</mosaic_0001>

<llo_original>
// kernel: tpu_custom_call.1
$region0: #{tpu_custom_call.1}
  #allocation0 [shape = 'u32[]', space=smem, size = 0x4, offset = 0x4, fixed_abs, tag = 'smem constant byte address 0x4 - core index']
  #allocation1 [shape = 'u32[144,128]{1,0:T(1,128)}', space=vmem, size = 0x12000, scoped, tag = 'internal scratch']
  %s0 = inlined_call_operand.hbm [shape: bf16[8,768], index: 0, kind: input, shape index: {}]
  %s1 = inlined_call_operand.hbm [shape: bf16[768,512], index: 1, kind: input, shape index: {}]
  %s2 = inlined_call_operand.hbm [shape: f32[3,512], index: 2, kind: input, shape index: {}]
  %s3 = inlined_call_operand.hbm [shape: bf16[512,512], index: 3, kind: input, shape index: {}]
  %s4 = inlined_call_operand.vmem [shape: f32[1,512], index: 4, kind: input, shape index: {}]
  %s5 = inlined_call_operand.hbm [shape: f32[1,8], index: 5, kind: output, shape index: {}]
  %s6 = sld [smem:[#allocation0]]
  $region46: #{tpu_custom_call.1} parent=0
    _
  %s8 = ssub.s32 1, %s6
  %s9 = scalar_select 0, %s8, %s6
  $region1: #{tpu_custom_call.1} parent=0
    #allocation2 [shape = 'u8[12288]{0}', space=vmem, size = 0x3000, scoped, tag = 'input window, operand 0, single buffered']
    #allocation3 [shape = 's32[1]{0}', space=sflag, size = 0x4, scoped, tag = 'scoped memory for tpu_custom_call.1']
    #allocation4 [shape = 's32[1]{0}', space=sflag, size = 0x4, scoped, tag = 'scoped memory for tpu_custom_call.1']
    #allocation5 [shape = 'u8[786432]{0}', space=vmem, size = 0xc0000, scoped, tag = 'input window, operand 1, single buffered']
    #allocation6 [shape = 's32[1]{0}', space=sflag, size = 0x4, scoped, tag = 'scoped memory for tpu_custom_call.1']
    #allocation7 [shape = 'u8[8192]{0}', space=vmem, size = 0x2000, scoped, tag = 'input window, operand 2, single buffered']
    #allocation8 [shape = 'u8[524288]{0}', space=vmem, size = 0x80000, scoped, tag = 'input window, operand 3, single buffered']
    #allocation9 [shape = 's32[1]{0}', space=sflag, size = 0x4, scoped, tag = 'scoped memory for tpu_custom_call.1']
    #allocation10 [shape = 'u8[512]{0}', space=vmem, size = 0x400, scoped, tag = 'output window, operand 0, single buffered']
    %10 = vsyncpa [#allocation3], 0
    %11 = vsyncpa [#allocation6], 0
    %12 = vsyncpa [#allocation9], 0
    %13 = vsyncpa [#allocation4], 0
    // Predicated region
    $region2: #{tpu_custom_call.1} parent=1 // pred_check
      _
    $region3: #{tpu_custom_call.1} parent=1 // pred_check_branch
      %15 = sbr.rel (0) target = $region5
    $region4: #{tpu_custom_call.1} parent=1 // pred_region
      %s17 = ssub.s32 384, 384
      %18 = vsyncadd [#allocation3], %s17
      %s20 = sshll.u32 [#allocation2], 4
      %s21 = int_to_ptr.vmem [resolvable:$true] %s20
      %23 = dma.hbm_to_vmem [thread:$0]  %s0, 384, %s21, [#allocation3]
    $region5: #{tpu_custom_call.1} parent=1 // pred_fallthru
      _
    // Predicated region
    $region6: #{tpu_custom_call.1} parent=1 // pred_check
      _
    $region7: #{tpu_custom_call.1} parent=1 // pred_check_branch
      %25 = sbr.rel (0) target = $region9
    $region8: #{tpu_custom_call.1} parent=1 // pred_region
      %s27 = ssub.s32 24576, 24576
      %28 = vsyncadd [#allocation6], %s27
      %s29 = sshll.u32 [#allocation5], 4
      %s30 = int_to_ptr.vmem [resolvable:$true] %s29
      %35 = dma.hbm_to_vmem [thread:$0]  %s1, 24576, %s30, [#allocation6], 256, 256, 16
    $region9: #{tpu_custom_call.1} parent=1 // pred_fallthru
      _
    // Predicated region
    $region10: #{tpu_custom_call.1} parent=1 // pred_check
      _
    $region11: #{tpu_custom_call.1} parent=1 // pred_check_branch
      %37 = sbr.rel (0) target = $region13
    $region12: #{tpu_custom_call.1} parent=1 // pred_region
      %s39 = ssub.s32 256, 256
      %40 = vsyncadd [#allocation6], %s39
      %s42 = sshll.u32 [#allocation7], 4
      %s43 = int_to_ptr.vmem [resolvable:$true] %s42
      %45 = dma.hbm_to_vmem [thread:$0]  %s2, 256, %s43, [#allocation6]
    $region13: #{tpu_custom_call.1} parent=1 // pred_fallthru
      _
    // Predicated region
    $region14: #{tpu_custom_call.1} parent=1 // pred_check
      _
    $region15: #{tpu_custom_call.1} parent=1 // pred_check_branch
      %47 = sbr.rel (0) target = $region17
    $region16: #{tpu_custom_call.1} parent=1 // pred_region
      %s49 = ssub.s32 16384, 16384
      %50 = vsyncadd [#allocation9], %s49
      %s51 = sshll.u32 [#allocation8], 4
      %s52 = int_to_ptr.vmem [resolvable:$true] %s51
      %57 = dma.hbm_to_vmem [thread:$0]  %s3, 16384, %s52, [#allocation9], 256, 256, 16
    $region17: #{tpu_custom_call.1} parent=1 // pred_fallthru
      _
    // Predicated region
    $region18: #{tpu_custom_call.1} parent=1 // pred_check
      _
    $region19: #{tpu_custom_call.1} parent=1 // pred_check_branch
      %59 = sbr.rel (0) target = $region21
    $region20: #{tpu_custom_call.1} parent=1 // pred_region
      _
    $region21: #{tpu_custom_call.1} parent=1 // pred_fallthru
      _
    // Predicated region
    $region22: #{tpu_custom_call.1} parent=1 // pred_check
      _
    $region23: #{tpu_custom_call.1} parent=1 // pred_check_branch
      %61 = sbr.rel (0) target = $region25
    $region24: #{tpu_custom_call.1} parent=1 // pred_region
      %62 = dma.done [#allocation3], 384
    $region25: #{tpu_custom_call.1} parent=1 // pred_fallthru
      _
    // Predicated region
    $region26: #{tpu_custom_call.1} parent=1 // pred_check
      _
    $region27: #{tpu_custom_call.1} parent=1 // pred_check_branch
      %64 = sbr.rel (0) target = $region29
    $region28: #{tpu_custom_call.1} parent=1 // pred_region
      %65 = dma.done [#allocation6], 24576
    $region29: #{tpu_custom_call.1} parent=1 // pred_fallthru
      _
    // Predicated region
    $region30: #{tpu_custom_call.1} parent=1 // pred_check
      _
    $region31: #{tpu_custom_call.1} parent=1 // pred_check_branch
      %67 = sbr.rel (0) target = $region33
    $region32: #{tpu_custom_call.1} parent=1 // pred_region
      %68 = dma.done [#allocation6], 256
    $region33: #{tpu_custom_call.1} parent=1 // pred_fallthru
      _
    // Predicated region
    $region34: #{tpu_custom_call.1} parent=1 // pred_check
      _
    $region35: #{tpu_custom_call.1} parent=1 // pred_check_branch
      %70 = sbr.rel (0) target = $region37
    $region36: #{tpu_custom_call.1} parent=1 // pred_region
      %71 = dma.done [#allocation9], 16384
    $region37: #{tpu_custom_call.1} parent=1 // pred_fallthru
      _
    %v72 = vld [vmem:[#allocation2] sm:$0xff]
    %v73 = vld [vmem:[#allocation2 + $0x8] sm:$0xff]
    %v74 = vld [vmem:[#allocation2 + $0x10] sm:$0xff]
    %v75 = vld [vmem:[#allocation5] sm:$0xff]
    %v76 = vld [vmem:[#allocation5 + $0x8] sm:$0xff]
    %v77 = vld [vmem:[#allocation5 + $0x10] sm:$0xff]
    %v78 = vld [vmem:[#allocation5 + $0x18] sm:$0xff]
    %v79 = vld [vmem:[#allocation5 + $0x20] sm:$0xff]
    %v80 = vld [vmem:[#allocation5 + $0x28] sm:$0xff]
    %v81 = vld [vmem:[#allocation5 + $0x30] sm:$0xff]
    %v82 = vld [vmem:[#allocation5 + $0x38] sm:$0xff]
    %v83 = vld [vmem:[#allocation5 + $0x40] sm:$0xff]
    %v84 = vld [vmem:[#allocation5 + $0x48] sm:$0xff]
    %v85 = vld [vmem:[#allocation5 + $0x50] sm:$0xff]
    %v86 = vld [vmem:[#allocation5 + $0x58] sm:$0xff]
    %v87 = vld [vmem:[#allocation5 + $0x60] sm:$0xff]
    %v88 = vld [vmem:[#allocation5 + $0x68] sm:$0xff]
    %v89 = vld [vmem:[#allocation5 + $0x70] sm:$0xff]
    %v90 = vld [vmem:[#allocation5 + $0x78] sm:$0xff]
    %v91 = vld [vmem:[#allocation5 + $0x80] sm:$0xff]
    %v92 = vld [vmem:[#allocation5 + $0x88] sm:$0xff]
    %v93 = vld [vmem:[#allocation5 + $0x90] sm:$0xff]
    %v94 = vld [vmem:[#allocation5 + $0x98] sm:$0xff]
    %v95 = vld [vmem:[#allocation5 + $0xa0] sm:$0xff]
    %v96 = vld [vmem:[#allocation5 + $0xa8] sm:$0xff]
    %v97 = vld [vmem:[#allocation5 + $0xb0] sm:$0xff]
    %v98 = vld [vmem:[#allocation5 + $0xb8] sm:$0xff]
    %v99 = vld [vmem:[#allocation5 + $0xc0] sm:$0xff]
    %v100 = vld [vmem:[#allocation5 + $0xc8] sm:$0xff]
    %v101 = vld [vmem:[#allocation5 + $0xd0] sm:$0xff]
    %v102 = vld [vmem:[#allocation5 + $0xd8] sm:$0xff]
    %v103 = vld [vmem:[#allocation5 + $0xe0] sm:$0xff]
    %v104 = vld [vmem:[#allocation5 + $0xe8] sm:$0xff]
    %v105 = vld [vmem:[#allocation5 + $0xf0] sm:$0xff]
    %v106 = vld [vmem:[#allocation5 + $0xf8] sm:$0xff]
    %v107 = vld [vmem:[#allocation5 + $0x100] sm:$0xff]
    %v108 = vld [vmem:[#allocation5 + $0x108] sm:$0xff]
    %v109 = vld [vmem:[#allocation5 + $0x110] sm:$0xff]
    %v110 = vld [vmem:[#allocation5 + $0x118] sm:$0xff]
    %v111 = vld [vmem:[#allocation5 + $0x120] sm:$0xff]
    %v112 = vld [vmem:[#allocation5 + $0x128] sm:$0xff]
    %v113 = vld [vmem:[#allocation5 + $0x130] sm:$0xff]
    %v114 = vld [vmem:[#allocation5 + $0x138] sm:$0xff]
    %v115 = vld [vmem:[#allocation5 + $0x140] sm:$0xff]
    %v116 = vld [vmem:[#allocation5 + $0x148] sm:$0xff]
    %v117 = vld [vmem:[#allocation5 + $0x150] sm:$0xff]
    %v118 = vld [vmem:[#allocation5 + $0x158] sm:$0xff]
    %v119 = vld [vmem:[#allocation5 + $0x160] sm:$0xff]
    %v120 = vld [vmem:[#allocation5 + $0x168] sm:$0xff]
    %v121 = vld [vmem:[#allocation5 + $0x170] sm:$0xff]
    %v122 = vld [vmem:[#allocation5 + $0x178] sm:$0xff]
    %v123 = vld [vmem:[#allocation5 + $0x180] sm:$0xff]
    %v124 = vld [vmem:[#allocation5 + $0x188] sm:$0xff]
    %v125 = vld [vmem:[#allocation5 + $0x190] sm:$0xff]
    %v126 = vld [vmem:[#allocation5 + $0x198] sm:$0xff]
    %v127 = vld [vmem:[#allocation5 + $0x1a0] sm:$0xff]
    %v128 = vld [vmem:[#allocation5 + $0x1a8] sm:$0xff]
    %v129 = vld [vmem:[#allocation5 + $0x1b0] sm:$0xff]
    %v130 = vld [vmem:[#allocation5 + $0x1b8] sm:$0xff]
    %v131 = vld [vmem:[#allocation5 + $0x1c0] sm:$0xff]
    %v132 = vld [vmem:[#allocation5 + $0x1c8] sm:$0xff]
    %v133 = vld [vmem:[#allocation5 + $0x1d0] sm:$0xff]
    %v134 = vld [vmem:[#allocation5 + $0x1d8] sm:$0xff]
    %v135 = vld [vmem:[#allocation5 + $0x1e0] sm:$0xff]
    %v136 = vld [vmem:[#allocation5 + $0x1e8] sm:$0xff]
    %v137 = vld [vmem:[#allocation5 + $0x1f0] sm:$0xff]
    %v138 = vld [vmem:[#allocation5 + $0x1f8] sm:$0xff]
    %v139 = vld [vmem:[#allocation5 + $0x200] sm:$0xff]
    %v140 = vld [vmem:[#allocation5 + $0x208] sm:$0xff]
    %v141 = vld [vmem:[#allocation5 + $0x210] sm:$0xff]
    %v142 = vld [vmem:[#allocation5 + $0x218] sm:$0xff]
    %v143 = vld [vmem:[#allocation5 + $0x220] sm:$0xff]
    %v144 = vld [vmem:[#allocation5 + $0x228] sm:$0xff]
    %v145 = vld [vmem:[#allocation5 + $0x230] sm:$0xff]
    %v146 = vld [vmem:[#allocation5 + $0x238] sm:$0xff]
    %v147 = vld [vmem:[#allocation5 + $0x240] sm:$0xff]
    %v148 = vld [vmem:[#allocation5 + $0x248] sm:$0xff]
    %v149 = vld [vmem:[#allocation5 + $0x250] sm:$0xff]
    %v150 = vld [vmem:[#allocation5 + $0x258] sm:$0xff]
    %v151 = vld [vmem:[#allocation5 + $0x260] sm:$0xff]
    %v152 = vld [vmem:[#allocation5 + $0x268] sm:$0xff]
    %v153 = vld [vmem:[#allocation5 + $0x270] sm:$0xff]
    %v154 = vld [vmem:[#allocation5 + $0x278] sm:$0xff]
    %v155 = vld [vmem:[#allocation5 + $0x280] sm:$0xff]
    %v156 = vld [vmem:[#allocation5 + $0x288] sm:$0xff]
    %v157 = vld [vmem:[#allocation5 + $0x290] sm:$0xff]
    %v158 = vld [vmem:[#allocation5 + $0x298] sm:$0xff]
    %v159 = vld [vmem:[#allocation5 + $0x2a0] sm:$0xff]
    %v160 = vld [vmem:[#allocation5 + $0x2a8] sm:$0xff]
    %v161 = vld [vmem:[#allocation5 + $0x2b0] sm:$0xff]
    %v162 = vld [vmem:[#allocation5 + $0x2b8] sm:$0xff]
    %v163 = vld [vmem:[#allocation5 + $0x2c0] sm:$0xff]
    %v164 = vld [vmem:[#allocation5 + $0x2c8] sm:$0xff]
    %v165 = vld [vmem:[#allocation5 + $0x2d0] sm:$0xff]
    %v166 = vld [vmem:[#allocation5 + $0x2d8] sm:$0xff]
    %v167 = vld [vmem:[#allocation5 + $0x2e0] sm:$0xff]
    %v168 = vld [vmem:[#allocation5 + $0x2e8] sm:$0xff]
    %v169 = vld [vmem:[#allocation5 + $0x2f0] sm:$0xff]
    %v170 = vld [vmem:[#allocation5 + $0x2f8] sm:$0xff]
    %v171 = vld [vmem:[#allocation5 + $0x300] sm:$0xff]
    %v172 = vld [vmem:[#allocation5 + $0x308] sm:$0xff]
    %v173 = vld [vmem:[#allocation5 + $0x310] sm:$0xff]
    %v174 = vld [vmem:[#allocation5 + $0x318] sm:$0xff]
    %v175 = vld [vmem:[#allocation5 + $0x320] sm:$0xff]
    %v176 = vld [vmem:[#allocation5 + $0x328] sm:$0xff]
    %v177 = vld [vmem:[#allocation5 + $0x330] sm:$0xff]
    %v178 = vld [vmem:[#allocation5 + $0x338] sm:$0xff]
    %v179 = vld [vmem:[#allocation5 + $0x340] sm:$0xff]
    %v180 = vld [vmem:[#allocation5 + $0x348] sm:$0xff]
    %v181 = vld [vmem:[#allocation5 + $0x350] sm:$0xff]
    %v182 = vld [vmem:[#allocation5 + $0x358] sm:$0xff]
    %v183 = vld [vmem:[#allocation5 + $0x360] sm:$0xff]
    %v184 = vld [vmem:[#allocation5 + $0x368] sm:$0xff]
    %v185 = vld [vmem:[#allocation5 + $0x370] sm:$0xff]
    %v186 = vld [vmem:[#allocation5 + $0x378] sm:$0xff]
    %v187 = vld [vmem:[#allocation5 + $0x380] sm:$0xff]
    %v188 = vld [vmem:[#allocation5 + $0x388] sm:$0xff]
    %v189 = vld [vmem:[#allocation5 + $0x390] sm:$0xff]
    %v190 = vld [vmem:[#allocation5 + $0x398] sm:$0xff]
    %v191 = vld [vmem:[#allocation5 + $0x3a0] sm:$0xff]
    %v192 = vld [vmem:[#allocation5 + $0x3a8] sm:$0xff]
    %v193 = vld [vmem:[#allocation5 + $0x3b0] sm:$0xff]
    %v194 = vld [vmem:[#allocation5 + $0x3b8] sm:$0xff]
    %v195 = vld [vmem:[#allocation5 + $0x3c0] sm:$0xff]
    %v196 = vld [vmem:[#allocation5 + $0x3c8] sm:$0xff]
    %v197 = vld [vmem:[#allocation5 + $0x3d0] sm:$0xff]
    %v198 = vld [vmem:[#allocation5 + $0x3d8] sm:$0xff]
    %v199 = vld [vmem:[#allocation5 + $0x3e0] sm:$0xff]
    %v200 = vld [vmem:[#allocation5 + $0x3e8] sm:$0xff]
    %v201 = vld [vmem:[#allocation5 + $0x3f0] sm:$0xff]
    %v202 = vld [vmem:[#allocation5 + $0x3f8] sm:$0xff]
    %v203 = vld [vmem:[#allocation5 + $0x400] sm:$0xff]
    %v204 = vld [vmem:[#allocation5 + $0x408] sm:$0xff]
    %v205 = vld [vmem:[#allocation5 + $0x410] sm:$0xff]
    %v206 = vld [vmem:[#allocation5 + $0x418] sm:$0xff]
    %v207 = vld [vmem:[#allocation5 + $0x420] sm:$0xff]
    %v208 = vld [vmem:[#allocation5 + $0x428] sm:$0xff]
    %v209 = vld [vmem:[#allocation5 + $0x430] sm:$0xff]
    %v210 = vld [vmem:[#allocation5 + $0x438] sm:$0xff]
    %v211 = vld [vmem:[#allocation5 + $0x440] sm:$0xff]
    %v212 = vld [vmem:[#allocation5 + $0x448] sm:$0xff]
    %v213 = vld [vmem:[#allocation5 + $0x450] sm:$0xff]
    %v214 = vld [vmem:[#allocation5 + $0x458] sm:$0xff]
    %v215 = vld [vmem:[#allocation5 + $0x460] sm:$0xff]
    %v216 = vld [vmem:[#allocation5 + $0x468] sm:$0xff]
    %v217 = vld [vmem:[#allocation5 + $0x470] sm:$0xff]
    %v218 = vld [vmem:[#allocation5 + $0x478] sm:$0xff]
    %v219 = vld [vmem:[#allocation5 + $0x480] sm:$0xff]
    %v220 = vld [vmem:[#allocation5 + $0x488] sm:$0xff]
    %v221 = vld [vmem:[#allocation5 + $0x490] sm:$0xff]
    %v222 = vld [vmem:[#allocation5 + $0x498] sm:$0xff]
    %v223 = vld [vmem:[#allocation5 + $0x4a0] sm:$0xff]
    %v224 = vld [vmem:[#allocation5 + $0x4a8] sm:$0xff]
    %v225 = vld [vmem:[#allocation5 + $0x4b0] sm:$0xff]
    %v226 = vld [vmem:[#allocation5 + $0x4b8] sm:$0xff]
    %v227 = vld [vmem:[#allocation5 + $0x4c0] sm:$0xff]
    %v228 = vld [vmem:[#allocation5 + $0x4c8] sm:$0xff]
    %v229 = vld [vmem:[#allocation5 + $0x4d0] sm:$0xff]
    %v230 = vld [vmem:[#allocation5 + $0x4d8] sm:$0xff]
    %v231 = vld [vmem:[#allocation5 + $0x4e0] sm:$0xff]
    %v232 = vld [vmem:[#allocation5 + $0x4e8] sm:$0xff]
    %v233 = vld [vmem:[#allocation5 + $0x4f0] sm:$0xff]
    %v234 = vld [vmem:[#allocation5 + $0x4f8] sm:$0xff]
    %v235 = vld [vmem:[#allocation5 + $0x500] sm:$0xff]
    %v236 = vld [vmem:[#allocation5 + $0x508] sm:$0xff]
    %v237 = vld [vmem:[#allocation5 + $0x510] sm:$0xff]
    %v238 = vld [vmem:[#allocation5 + $0x518] sm:$0xff]
    %v239 = vld [vmem:[#allocation5 + $0x520] sm:$0xff]
    %v240 = vld [vmem:[#allocation5 + $0x528] sm:$0xff]
    %v241 = vld [vmem:[#allocation5 + $0x530] sm:$0xff]
    %v242 = vld [vmem:[#allocation5 + $0x538] sm:$0xff]
    %v243 = vld [vmem:[#allocation5 + $0x540] sm:$0xff]
    %v244 = vld [vmem:[#allocation5 + $0x548] sm:$0xff]
    %v245 = vld [vmem:[#allocation5 + $0x550] sm:$0xff]
    %v246 = vld [vmem:[#allocation5 + $0x558] sm:$0xff]
    %v247 = vld [vmem:[#allocation5 + $0x560] sm:$0xff]
    %v248 = vld [vmem:[#allocation5 + $0x568] sm:$0xff]
    %v249 = vld [vmem:[#allocation5 + $0x570] sm:$0xff]
    %v250 = vld [vmem:[#allocation5 + $0x578] sm:$0xff]
    %v251 = vld [vmem:[#allocation5 + $0x580] sm:$0xff]
    %v252 = vld [vmem:[#allocation5 + $0x588] sm:$0xff]
    %v253 = vld [vmem:[#allocation5 + $0x590] sm:$0xff]
    %v254 = vld [vmem:[#allocation5 + $0x598] sm:$0xff]
    %v255 = vld [vmem:[#allocation5 + $0x5a0] sm:$0xff]
    %v256 = vld [vmem:[#allocation5 + $0x5a8] sm:$0xff]
    %v257 = vld [vmem:[#allocation5 + $0x5b0] sm:$0xff]
    %v258 = vld [vmem:[#allocation5 + $0x5b8] sm:$0xff]
    %v259 = vld [vmem:[#allocation5 + $0x5c0] sm:$0xff]
    %v260 = vld [vmem:[#allocation5 + $0x5c8] sm:$0xff]
    %v261 = vld [vmem:[#allocation5 + $0x5d0] sm:$0xff]
    %v262 = vld [vmem:[#allocation5 + $0x5d8] sm:$0xff]
    %v263 = vld [vmem:[#allocation5 + $0x5e0] sm:$0xff]
    %v264 = vld [vmem:[#allocation5 + $0x5e8] sm:$0xff]
    %v265 = vld [vmem:[#allocation5 + $0x5f0] sm:$0xff]
    %v266 = vld [vmem:[#allocation5 + $0x5f8] sm:$0xff]
    %v267 = vld [vmem:[#allocation7] ss:$4 sm:$0xf]
    %v269 = vlaneseq
    %v270 = vshrl.u32 %v269, 7
    %v271 = vsub.s32 0, %v270
    %v272 = vrot.slane %v267, %v271
    %v273 = vlaneseq
    %v274 = vshrl.u32 %v273, 7
    %v275 = vsub.s32 1, %v274
    %v276 = vrot.slane %v267, %v275
    %v277 = vlaneseq
    %v278 = vshrl.u32 %v277, 7
    %v279 = vsub.s32 2, %v278
    %v280 = vrot.slane %v267, %v279
    %v281 = vlaneseq
    %v282 = vshrl.u32 %v281, 7
    %v283 = vsub.s32 3, %v282
    %v284 = vrot.slane %v267, %v283
    %v292 = vunpack.c.l.b16 %v72
    %v293 = vunpack.c.h.b16 %v72
    %v294 = vunpack.c.l.b16 %v73
    %v295 = vunpack.c.h.b16 %v73
    %v296 = vunpack.c.l.b16 %v74
    %v297 = vunpack.c.h.b16 %v74
    %v298 = vpack.c.b16 %v292, %v292
    %v299 = vpack.c.b16 %v293, %v293
    %v300 = vpack.c.b16 %v294, %v294
    %v301 = vpack.c.b16 %v295, %v295
    %v302 = vpack.c.b16 %v296, %v296
    %v303 = vpack.c.b16 %v297, %v297
    %v502 = vunpack.c.l.b16 %v75
    %v503 = vunpack.c.h.b16 %v75
    %v504 = vunpack.c.l.b16 %v76
    %v505 = vunpack.c.h.b16 %v76
    %v506 = vunpack.c.l.b16 %v77
    %v507 = vunpack.c.h.b16 %v77
    %v508 = vunpack.c.l.b16 %v78
    %v509 = vunpack.c.h.b16 %v78
    %v510 = vunpack.c.l.b16 %v79
    %v511 = vunpack.c.h.b16 %v79
    %v512 = vunpack.c.l.b16 %v80
    %v513 = vunpack.c.h.b16 %v80
    %v514 = vunpack.c.l.b16 %v81
    %v515 = vunpack.c.h.b16 %v81
    %v516 = vunpack.c.l.b16 %v82
    %v517 = vunpack.c.h.b16 %v82
    %v518 = vunpack.c.l.b16 %v83
    %v519 = vunpack.c.h.b16 %v83
    %v520 = vunpack.c.l.b16 %v84
    %v521 = vunpack.c.h.b16 %v84
    %v522 = vunpack.c.l.b16 %v85
    %v523 = vunpack.c.h.b16 %v85
    %v524 = vunpack.c.l.b16 %v86
    %v525 = vunpack.c.h.b16 %v86
    %v526 = vunpack.c.l.b16 %v87
    %v527 = vunpack.c.h.b16 %v87
    %v528 = vunpack.c.l.b16 %v88
    %v529 = vunpack.c.h.b16 %v88
    %v530 = vunpack.c.l.b16 %v89
    %v531 = vunpack.c.h.b16 %v89
    %v532 = vunpack.c.l.b16 %v90
    %v533 = vunpack.c.h.b16 %v90
    %v534 = vunpack.c.l.b16 %v91
    %v535 = vunpack.c.h.b16 %v91
    %v536 = vunpack.c.l.b16 %v92
    %v537 = vunpack.c.h.b16 %v92
    %v538 = vunpack.c.l.b16 %v93
    %v539 = vunpack.c.h.b16 %v93
    %v540 = vunpack.c.l.b16 %v94
    %v541 = vunpack.c.h.b16 %v94
    %v542 = vunpack.c.l.b16 %v95
    %v543 = vunpack.c.h.b16 %v95
    %v544 = vunpack.c.l.b16 %v96
    %v545 = vunpack.c.h.b16 %v96
    %v546 = vunpack.c.l.b16 %v97
    %v547 = vunpack.c.h.b16 %v97
    %v548 = vunpack.c.l.b16 %v98
    %v549 = vunpack.c.h.b16 %v98
    %v550 = vunpack.c.l.b16 %v99
    %v551 = vunpack.c.h.b16 %v99
    %v552 = vunpack.c.l.b16 %v100
    %v553 = vunpack.c.h.b16 %v100
    %v554 = vunpack.c.l.b16 %v101
    %v555 = vunpack.c.h.b16 %v101
    %v556 = vunpack.c.l.b16 %v102
    %v557 = vunpack.c.h.b16 %v102
    %v558 = vunpack.c.l.b16 %v103
    %v559 = vunpack.c.h.b16 %v103
    %v560 = vunpack.c.l.b16 %v104
    %v561 = vunpack.c.h.b16 %v104
    %v562 = vunpack.c.l.b16 %v105
    %v563 = vunpack.c.h.b16 %v105
    %v564 = vunpack.c.l.b16 %v106
    %v565 = vunpack.c.h.b16 %v106
    %v566 = vunpack.c.l.b16 %v107
    %v567 = vunpack.c.h.b16 %v107
    %v568 = vunpack.c.l.b16 %v108
    %v569 = vunpack.c.h.b16 %v108
    %v570 = vunpack.c.l.b16 %v109
    %v571 = vunpack.c.h.b16 %v109
    %v572 = vunpack.c.l.b16 %v110
    %v573 = vunpack.c.h.b16 %v110
    %v574 = vunpack.c.l.b16 %v111
    %v575 = vunpack.c.h.b16 %v111
    %v576 = vunpack.c.l.b16 %v112
    %v577 = vunpack.c.h.b16 %v112
    %v578 = vunpack.c.l.b16 %v113
    %v579 = vunpack.c.h.b16 %v113
    %v580 = vunpack.c.l.b16 %v114
    %v581 = vunpack.c.h.b16 %v114
    %v582 = vunpack.c.l.b16 %v115
    %v583 = vunpack.c.h.b16 %v115
    %v584 = vunpack.c.l.b16 %v116
    %v585 = vunpack.c.h.b16 %v116
    %v586 = vunpack.c.l.b16 %v117
    %v587 = vunpack.c.h.b16 %v117
    %v588 = vunpack.c.l.b16 %v118
    %v589 = vunpack.c.h.b16 %v118
    %v590 = vunpack.c.l.b16 %v119
    %v591 = vunpack.c.h.b16 %v119
    %v592 = vunpack.c.l.b16 %v120
    %v593 = vunpack.c.h.b16 %v120
    %v594 = vunpack.c.l.b16 %v121
    %v595 = vunpack.c.h.b16 %v121
    %v596 = vunpack.c.l.b16 %v122
    %v597 = vunpack.c.h.b16 %v122
    %v598 = vunpack.c.l.b16 %v123
    %v599 = vunpack.c.h.b16 %v123
    %v600 = vunpack.c.l.b16 %v124
    %v601 = vunpack.c.h.b16 %v124
    %v602 = vunpack.c.l.b16 %v125
    %v603 = vunpack.c.h.b16 %v125
    %v604 = vunpack.c.l.b16 %v126
    %v605 = vunpack.c.h.b16 %v126
    %v606 = vunpack.c.l.b16 %v127
    %v607 = vunpack.c.h.b16 %v127
    %v608 = vunpack.c.l.b16 %v128
    %v609 = vunpack.c.h.b16 %v128
    %v610 = vunpack.c.l.b16 %v129
    %v611 = vunpack.c.h.b16 %v129
    %v612 = vunpack.c.l.b16 %v130
    %v613 = vunpack.c.h.b16 %v130
    %v614 = vunpack.c.l.b16 %v131
    %v615 = vunpack.c.h.b16 %v131
    %v616 = vunpack.c.l.b16 %v132
    %v617 = vunpack.c.h.b16 %v132
    %v618 = vunpack.c.l.b16 %v133
    %v619 = vunpack.c.h.b16 %v133
    %v620 = vunpack.c.l.b16 %v134
    %v621 = vunpack.c.h.b16 %v134
    %v622 = vunpack.c.l.b16 %v135
    %v623 = vunpack.c.h.b16 %v135
    %v624 = vunpack.c.l.b16 %v136
    %v625 = vunpack.c.h.b16 %v136
    %v626 = vunpack.c.l.b16 %v137
    %v627 = vunpack.c.h.b16 %v137
    %v628 = vunpack.c.l.b16 %v138
    %v629 = vunpack.c.h.b16 %v138
    %v630 = vunpack.c.l.b16 %v139
    %v631 = vunpack.c.h.b16 %v139
    %v632 = vunpack.c.l.b16 %v140
    %v633 = vunpack.c.h.b16 %v140
    %v634 = vunpack.c.l.b16 %v141
    %v635 = vunpack.c.h.b16 %v141
    %v636 = vunpack.c.l.b16 %v142
    %v637 = vunpack.c.h.b16 %v142
    %v638 = vunpack.c.l.b16 %v143
    %v639 = vunpack.c.h.b16 %v143
    %v640 = vunpack.c.l.b16 %v144
    %v641 = vunpack.c.h.b16 %v144
    %v642 = vunpack.c.l.b16 %v145
    %v643 = vunpack.c.h.b16 %v145
    %v644 = vunpack.c.l.b16 %v146
    %v645 = vunpack.c.h.b16 %v146
    %v646 = vunpack.c.l.b16 %v147
    %v647 = vunpack.c.h.b16 %v147
    %v648 = vunpack.c.l.b16 %v148
    %v649 = vunpack.c.h.b16 %v148
    %v650 = vunpack.c.l.b16 %v149
    %v651 = vunpack.c.h.b16 %v149
    %v652 = vunpack.c.l.b16 %v150
    %v653 = vunpack.c.h.b16 %v150
    %v654 = vunpack.c.l.b16 %v151
    %v655 = vunpack.c.h.b16 %v151
    %v656 = vunpack.c.l.b16 %v152
    %v657 = vunpack.c.h.b16 %v152
    %v658 = vunpack.c.l.b16 %v153
    %v659 = vunpack.c.h.b16 %v153
    %v660 = vunpack.c.l.b16 %v154
    %v661 = vunpack.c.h.b16 %v154
    %v662 = vunpack.c.l.b16 %v155
    %v663 = vunpack.c.h.b16 %v155
    %v664 = vunpack.c.l.b16 %v156
    %v665 = vunpack.c.h.b16 %v156
    %v666 = vunpack.c.l.b16 %v157
    %v667 = vunpack.c.h.b16 %v157
    %v668 = vunpack.c.l.b16 %v158
    %v669 = vunpack.c.h.b16 %v158
    %v670 = vunpack.c.l.b16 %v159
    %v671 = vunpack.c.h.b16 %v159
    %v672 = vunpack.c.l.b16 %v160
    %v673 = vunpack.c.h.b16 %v160
    %v674 = vunpack.c.l.b16 %v161
    %v675 = vunpack.c.h.b16 %v161
    %v676 = vunpack.c.l.b16 %v162
    %v677 = vunpack.c.h.b16 %v162
    %v678 = vunpack.c.l.b16 %v163
    %v679 = vunpack.c.h.b16 %v163
    %v680 = vunpack.c.l.b16 %v164
    %v681 = vunpack.c.h.b16 %v164
    %v682 = vunpack.c.l.b16 %v165
    %v683 = vunpack.c.h.b16 %v165
    %v684 = vunpack.c.l.b16 %v166
    %v685 = vunpack.c.h.b16 %v166
    %v686 = vunpack.c.l.b16 %v167
    %v687 = vunpack.c.h.b16 %v167
    %v688 = vunpack.c.l.b16 %v168
    %v689 = vunpack.c.h.b16 %v168
    %v690 = vunpack.c.l.b16 %v169
    %v691 = vunpack.c.h.b16 %v169
    %v692 = vunpack.c.l.b16 %v170
    %v693 = vunpack.c.h.b16 %v170
    %v694 = vunpack.c.l.b16 %v171
    %v695 = vunpack.c.h.b16 %v171
    %v696 = vunpack.c.l.b16 %v172
    %v697 = vunpack.c.h.b16 %v172
    %v698 = vunpack.c.l.b16 %v173
    %v699 = vunpack.c.h.b16 %v173
    %v700 = vunpack.c.l.b16 %v174
    %v701 = vunpack.c.h.b16 %v174
    %v702 = vunpack.c.l.b16 %v175
    %v703 = vunpack.c.h.b16 %v175
    %v704 = vunpack.c.l.b16 %v176
    %v705 = vunpack.c.h.b16 %v176
    %v706 = vunpack.c.l.b16 %v177
    %v707 = vunpack.c.h.b16 %v177
    %v708 = vunpack.c.l.b16 %v178
    %v709 = vunpack.c.h.b16 %v178
    %v710 = vunpack.c.l.b16 %v179
    %v711 = vunpack.c.h.b16 %v179
    %v712 = vunpack.c.l.b16 %v180
    %v713 = vunpack.c.h.b16 %v180
    %v714 = vunpack.c.l.b16 %v181
    %v715 = vunpack.c.h.b16 %v181
    %v716 = vunpack.c.l.b16 %v182
    %v717 = vunpack.c.h.b16 %v182
    %v718 = vunpack.c.l.b16 %v183
    %v719 = vunpack.c.h.b16 %v183
    %v720 = vunpack.c.l.b16 %v184
    %v721 = vunpack.c.h.b16 %v184
    %v722 = vunpack.c.l.b16 %v185
    %v723 = vunpack.c.h.b16 %v185
    %v724 = vunpack.c.l.b16 %v186
    %v725 = vunpack.c.h.b16 %v186
    %v726 = vunpack.c.l.b16 %v187
    %v727 = vunpack.c.h.b16 %v187
    %v728 = vunpack.c.l.b16 %v188
    %v729 = vunpack.c.h.b16 %v188
    %v730 = vunpack.c.l.b16 %v189
    %v731 = vunpack.c.h.b16 %v189
    %v732 = vunpack.c.l.b16 %v190
    %v733 = vunpack.c.h.b16 %v190
    %v734 = vunpack.c.l.b16 %v191
    %v735 = vunpack.c.h.b16 %v191
    %v736 = vunpack.c.l.b16 %v192
    %v737 = vunpack.c.h.b16 %v192
    %v738 = vunpack.c.l.b16 %v193
    %v739 = vunpack.c.h.b16 %v193
    %v740 = vunpack.c.l.b16 %v194
    %v741 = vunpack.c.h.b16 %v194
    %v742 = vunpack.c.l.b16 %v195
    %v743 = vunpack.c.h.b16 %v195
    %v744 = vunpack.c.l.b16 %v196
    %v745 = vunpack.c.h.b16 %v196
    %v746 = vunpack.c.l.b16 %v197
    %v747 = vunpack.c.h.b16 %v197
    %v748 = vunpack.c.l.b16 %v198
    %v749 = vunpack.c.h.b16 %v198
    %v750 = vunpack.c.l.b16 %v199
    %v751 = vunpack.c.h.b16 %v199
    %v752 = vunpack.c.l.b16 %v200
    %v753 = vunpack.c.h.b16 %v200
    %v754 = vunpack.c.l.b16 %v201
    %v755 = vunpack.c.h.b16 %v201
    %v756 = vunpack.c.l.b16 %v202
    %v757 = vunpack.c.h.b16 %v202
    %v758 = vunpack.c.l.b16 %v203
    %v759 = vunpack.c.h.b16 %v203
    %v760 = vunpack.c.l.b16 %v204
    %v761 = vunpack.c.h.b16 %v204
    %v762 = vunpack.c.l.b16 %v205
    %v763 = vunpack.c.h.b16 %v205
    %v764 = vunpack.c.l.b16 %v206
    %v765 = vunpack.c.h.b16 %v206
    %v766 = vunpack.c.l.b16 %v207
    %v767 = vunpack.c.h.b16 %v207
    %v768 = vunpack.c.l.b16 %v208
    %v769 = vunpack.c.h.b16 %v208
    %v770 = vunpack.c.l.b16 %v209
    %v771 = vunpack.c.h.b16 %v209
    %v772 = vunpack.c.l.b16 %v210
    %v773 = vunpack.c.h.b16 %v210
    %v774 = vunpack.c.l.b16 %v211
    %v775 = vunpack.c.h.b16 %v211
    %v776 = vunpack.c.l.b16 %v212
    %v777 = vunpack.c.h.b16 %v212
    %v778 = vunpack.c.l.b16 %v213
    %v779 = vunpack.c.h.b16 %v213
    %v780 = vunpack.c.l.b16 %v214
    %v781 = vunpack.c.h.b16 %v214
    %v782 = vunpack.c.l.b16 %v215
    %v783 = vunpack.c.h.b16 %v215
    %v784 = vunpack.c.l.b16 %v216
    %v785 = vunpack.c.h.b16 %v216
    %v786 = vunpack.c.l.b16 %v217
    %v787 = vunpack.c.h.b16 %v217
    %v788 = vunpack.c.l.b16 %v218
    %v789 = vunpack.c.h.b16 %v218
    %v790 = vunpack.c.l.b16 %v219
    %v791 = vunpack.c.h.b16 %v219
    %v792 = vunpack.c.l.b16 %v220
    %v793 = vunpack.c.h.b16 %v220
    %v794 = vunpack.c.l.b16 %v221
    %v795 = vunpack.c.h.b16 %v221
    %v796 = vunpack.c.l.b16 %v222
    %v797 = vunpack.c.h.b16 %v222
    %v798 = vunpack.c.l.b16 %v223
    %v799 = vunpack.c.h.b16 %v223
    %v800 = vunpack.c.l.b16 %v224
    %v801 = vunpack.c.h.b16 %v224
    %v802 = vunpack.c.l.b16 %v225
    %v803 = vunpack.c.h.b16 %v225
    %v804 = vunpack.c.l.b16 %v226
    %v805 = vunpack.c.h.b16 %v226
    %v806 = vunpack.c.l.b16 %v227
    %v807 = vunpack.c.h.b16 %v227
    %v808 = vunpack.c.l.b16 %v228
    %v809 = vunpack.c.h.b16 %v228
    %v810 = vunpack.c.l.b16 %v229
    %v811 = vunpack.c.h.b16 %v229
    %v812 = vunpack.c.l.b16 %v230
    %v813 = vunpack.c.h.b16 %v230
    %v814 = vunpack.c.l.b16 %v231
    %v815 = vunpack.c.h.b16 %v231
    %v816 = vunpack.c.l.b16 %v232
    %v817 = vunpack.c.h.b16 %v232
    %v818 = vunpack.c.l.b16 %v233
    %v819 = vunpack.c.h.b16 %v233
    %v820 = vunpack.c.l.b16 %v234
    %v821 = vunpack.c.h.b16 %v234
    %v822 = vunpack.c.l.b16 %v235
    %v823 = vunpack.c.h.b16 %v235
    %v824 = vunpack.c.l.b16 %v236
    %v825 = vunpack.c.h.b16 %v236
    %v826 = vunpack.c.l.b16 %v237
    %v827 = vunpack.c.h.b16 %v237
    %v828 = vunpack.c.l.b16 %v238
    %v829 = vunpack.c.h.b16 %v238
    %v830 = vunpack.c.l.b16 %v239
    %v831 = vunpack.c.h.b16 %v239
    %v832 = vunpack.c.l.b16 %v240
    %v833 = vunpack.c.h.b16 %v240
    %v834 = vunpack.c.l.b16 %v241
    %v835 = vunpack.c.h.b16 %v241
    %v836 = vunpack.c.l.b16 %v242
    %v837 = vunpack.c.h.b16 %v242
    %v838 = vunpack.c.l.b16 %v243
    %v839 = vunpack.c.h.b16 %v243
    %v840 = vunpack.c.l.b16 %v244
    %v841 = vunpack.c.h.b16 %v244
    %v842 = vunpack.c.l.b16 %v245
    %v843 = vunpack.c.h.b16 %v245
    %v844 = vunpack.c.l.b16 %v246
    %v845 = vunpack.c.h.b16 %v246
    %v846 = vunpack.c.l.b16 %v247
    %v847 = vunpack.c.h.b16 %v247
    %v848 = vunpack.c.l.b16 %v248
    %v849 = vunpack.c.h.b16 %v248
    %v850 = vunpack.c.l.b16 %v249
    %v851 = vunpack.c.h.b16 %v249
    %v852 = vunpack.c.l.b16 %v250
    %v853 = vunpack.c.h.b16 %v250
    %v854 = vunpack.c.l.b16 %v251
    %v855 = vunpack.c.h.b16 %v251
    %v856 = vunpack.c.l.b16 %v252
    %v857 = vunpack.c.h.b16 %v252
    %v858 = vunpack.c.l.b16 %v253
    %v859 = vunpack.c.h.b16 %v253
    %v860 = vunpack.c.l.b16 %v254
    %v861 = vunpack.c.h.b16 %v254
    %v862 = vunpack.c.l.b16 %v255
    %v863 = vunpack.c.h.b16 %v255
    %v864 = vunpack.c.l.b16 %v256
    %v865 = vunpack.c.h.b16 %v256
    %v866 = vunpack.c.l.b16 %v257
    %v867 = vunpack.c.h.b16 %v257
    %v868 = vunpack.c.l.b16 %v258
    %v869 = vunpack.c.h.b16 %v258
    %v870 = vunpack.c.l.b16 %v259
    %v871 = vunpack.c.h.b16 %v259
    %v872 = vunpack.c.l.b16 %v260
    %v873 = vunpack.c.h.b16 %v260
    %v874 = vunpack.c.l.b16 %v261
    %v875 = vunpack.c.h.b16 %v261
    %v876 = vunpack.c.l.b16 %v262
    %v877 = vunpack.c.h.b16 %v262
    %v878 = vunpack.c.l.b16 %v263
    %v879 = vunpack.c.h.b16 %v263
    %v880 = vunpack.c.l.b16 %v264
    %v881 = vunpack.c.h.b16 %v264
    %v882 = vunpack.c.l.b16 %v265
    %v883 = vunpack.c.h.b16 %v265
    %v884 = vunpack.c.l.b16 %v266
    %v885 = vunpack.c.h.b16 %v266
    %v886 = vpack.c.b16 %v506, %v502
    %v887 = vpack.c.b16 %v507, %v503
    %v888 = vpack.c.b16 %v508, %v504
    %v889 = vpack.c.b16 %v509, %v505
    %v890 = vpack.c.b16 %v514, %v510
    %v891 = vpack.c.b16 %v515, %v511
    %v892 = vpack.c.b16 %v516, %v512
    %v893 = vpack.c.b16 %v517, %v513
    %v894 = vpack.c.b16 %v522, %v518
    %v895 = vpack.c.b16 %v523, %v519
    %v896 = vpack.c.b16 %v524, %v520
    %v897 = vpack.c.b16 %v525, %v521
    %v898 = vpack.c.b16 %v530, %v526
    %v899 = vpack.c.b16 %v531, %v527
    %v900 = vpack.c.b16 %v532, %v528
    %v901 = vpack.c.b16 %v533, %v529
    %v902 = vpack.c.b16 %v538, %v534
    %v903 = vpack.c.b16 %v539, %v535
    %v904 = vpack.c.b16 %v540, %v536
    %v905 = vpack.c.b16 %v541, %v537
    %v906 = vpack.c.b16 %v546, %v542
    %v907 = vpack.c.b16 %v547, %v543
    %v908 = vpack.c.b16 %v548, %v544
    %v909 = vpack.c.b16 %v549, %v545
    %v910 = vpack.c.b16 %v554, %v550
    %v911 = vpack.c.b16 %v555, %v551
    %v912 = vpack.c.b16 %v556, %v552
    %v913 = vpack.c.b16 %v557, %v553
    %v914 = vpack.c.b16 %v562, %v558
    %v915 = vpack.c.b16 %v563, %v559
    %v916 = vpack.c.b16 %v564, %v560
    %v917 = vpack.c.b16 %v565, %v561
    %v918 = vpack.c.b16 %v570, %v566
    %v919 = vpack.c.b16 %v571, %v567
    %v920 = vpack.c.b16 %v572, %v568
    %v921 = vpack.c.b16 %v573, %v569
    %v922 = vpack.c.b16 %v578, %v574
    %v923 = vpack.c.b16 %v579, %v575
    %v924 = vpack.c.b16 %v580, %v576
    %v925 = vpack.c.b16 %v581, %v577
    %v926 = vpack.c.b16 %v586, %v582
    %v927 = vpack.c.b16 %v587, %v583
    %v928 = vpack.c.b16 %v588, %v584
    %v929 = vpack.c.b16 %v589, %v585
    %v930 = vpack.c.b16 %v594, %v590
    %v931 = vpack.c.b16 %v595, %v591
    %v932 = vpack.c.b16 %v596, %v592
    %v933 = vpack.c.b16 %v597, %v593
    %v934 = vpack.c.b16 %v602, %v598
    %v935 = vpack.c.b16 %v603, %v599
    %v936 = vpack.c.b16 %v604, %v600
    %v937 = vpack.c.b16 %v605, %v601
    %v938 = vpack.c.b16 %v610, %v606
    %v939 = vpack.c.b16 %v611, %v607
    %v940 = vpack.c.b16 %v612, %v608
    %v941 = vpack.c.b16 %v613, %v609
    %v942 = vpack.c.b16 %v618, %v614
    %v943 = vpack.c.b16 %v619, %v615
    %v944 = vpack.c.b16 %v620, %v616
    %v945 = vpack.c.b16 %v621, %v617
    %v946 = vpack.c.b16 %v626, %v622
    %v947 = vpack.c.b16 %v627, %v623
    %v948 = vpack.c.b16 %v628, %v624
    %v949 = vpack.c.b16 %v629, %v625
    %v950 = vpack.c.b16 %v634, %v630
    %v951 = vpack.c.b16 %v635, %v631
    %v952 = vpack.c.b16 %v636, %v632
    %v953 = vpack.c.b16 %v637, %v633
    %v954 = vpack.c.b16 %v642, %v638
    %v955 = vpack.c.b16 %v643, %v639
    %v956 = vpack.c.b16 %v644, %v640
    %v957 = vpack.c.b16 %v645, %v641
    %v958 = vpack.c.b16 %v650, %v646
    %v959 = vpack.c.b16 %v651, %v647
    %v960 = vpack.c.b16 %v652, %v648
    %v961 = vpack.c.b16 %v653, %v649
    %v962 = vpack.c.b16 %v658, %v654
    %v963 = vpack.c.b16 %v659, %v655
    %v964 = vpack.c.b16 %v660, %v656
    %v965 = vpack.c.b16 %v661, %v657
    %v966 = vpack.c.b16 %v666, %v662
    %v967 = vpack.c.b16 %v667, %v663
    %v968 = vpack.c.b16 %v668, %v664
    %v969 = vpack.c.b16 %v669, %v665
    %v970 = vpack.c.b16 %v674, %v670
    %v971 = vpack.c.b16 %v675, %v671
    %v972 = vpack.c.b16 %v676, %v672
    %v973 = vpack.c.b16 %v677, %v673
    %v974 = vpack.c.b16 %v682, %v678
    %v975 = vpack.c.b16 %v683, %v679
    %v976 = vpack.c.b16 %v684, %v680
    %v977 = vpack.c.b16 %v685, %v681
    %v978 = vpack.c.b16 %v690, %v686
    %v979 = vpack.c.b16 %v691, %v687
    %v980 = vpack.c.b16 %v692, %v688
    %v981 = vpack.c.b16 %v693, %v689
    %v982 = vpack.c.b16 %v698, %v694
    %v983 = vpack.c.b16 %v699, %v695
    %v984 = vpack.c.b16 %v700, %v696
    %v985 = vpack.c.b16 %v701, %v697
    %v986 = vpack.c.b16 %v706, %v702
    %v987 = vpack.c.b16 %v707, %v703
    %v988 = vpack.c.b16 %v708, %v704
    %v989 = vpack.c.b16 %v709, %v705
    %v990 = vpack.c.b16 %v714, %v710
    %v991 = vpack.c.b16 %v715, %v711
    %v992 = vpack.c.b16 %v716, %v712
    %v993 = vpack.c.b16 %v717, %v713
    %v994 = vpack.c.b16 %v722, %v718
    %v995 = vpack.c.b16 %v723, %v719
    %v996 = vpack.c.b16 %v724, %v720
    %v997 = vpack.c.b16 %v725, %v721
    %v998 = vpack.c.b16 %v730, %v726
    %v999 = vpack.c.b16 %v731, %v727
    %v1000 = vpack.c.b16 %v732, %v728
    %v1001 = vpack.c.b16 %v733, %v729
    %v1002 = vpack.c.b16 %v738, %v734
    %v1003 = vpack.c.b16 %v739, %v735
    %v1004 = vpack.c.b16 %v740, %v736
    %v1005 = vpack.c.b16 %v741, %v737
    %v1006 = vpack.c.b16 %v746, %v742
    %v1007 = vpack.c.b16 %v747, %v743
    %v1008 = vpack.c.b16 %v748, %v744
    %v1009 = vpack.c.b16 %v749, %v745
    %v1010 = vpack.c.b16 %v754, %v750
    %v1011 = vpack.c.b16 %v755, %v751
    %v1012 = vpack.c.b16 %v756, %v752
    %v1013 = vpack.c.b16 %v757, %v753
    %v1014 = vpack.c.b16 %v762, %v758
    %v1015 = vpack.c.b16 %v763, %v759
    %v1016 = vpack.c.b16 %v764, %v760
    %v1017 = vpack.c.b16 %v765, %v761
    %v1018 = vpack.c.b16 %v770, %v766
    %v1019 = vpack.c.b16 %v771, %v767
    %v1020 = vpack.c.b16 %v772, %v768
    %v1021 = vpack.c.b16 %v773, %v769
    %v1022 = vpack.c.b16 %v778, %v774
    %v1023 = vpack.c.b16 %v779, %v775
    %v1024 = vpack.c.b16 %v780, %v776
    %v1025 = vpack.c.b16 %v781, %v777
    %v1026 = vpack.c.b16 %v786, %v782
    %v1027 = vpack.c.b16 %v787, %v783
    %v1028 = vpack.c.b16 %v788, %v784
    %v1029 = vpack.c.b16 %v789, %v785
    %v1030 = vpack.c.b16 %v794, %v790
    %v1031 = vpack.c.b16 %v795, %v791
    %v1032 = vpack.c.b16 %v796, %v792
    %v1033 = vpack.c.b16 %v797, %v793
    %v1034 = vpack.c.b16 %v802, %v798
    %v1035 = vpack.c.b16 %v803, %v799
    %v1036 = vpack.c.b16 %v804, %v800
    %v1037 = vpack.c.b16 %v805, %v801
    %v1038 = vpack.c.b16 %v810, %v806
    %v1039 = vpack.c.b16 %v811, %v807
    %v1040 = vpack.c.b16 %v812, %v808
    %v1041 = vpack.c.b16 %v813, %v809
    %v1042 = vpack.c.b16 %v818, %v814
    %v1043 = vpack.c.b16 %v819, %v815
    %v1044 = vpack.c.b16 %v820, %v816
    %v1045 = vpack.c.b16 %v821, %v817
    %v1046 = vpack.c.b16 %v826, %v822
    %v1047 = vpack.c.b16 %v827, %v823
    %v1048 = vpack.c.b16 %v828, %v824
    %v1049 = vpack.c.b16 %v829, %v825
    %v1050 = vpack.c.b16 %v834, %v830
    %v1051 = vpack.c.b16 %v835, %v831
    %v1052 = vpack.c.b16 %v836, %v832
    %v1053 = vpack.c.b16 %v837, %v833
    %v1054 = vpack.c.b16 %v842, %v838
    %v1055 = vpack.c.b16 %v843, %v839
    %v1056 = vpack.c.b16 %v844, %v840
    %v1057 = vpack.c.b16 %v845, %v841
    %v1058 = vpack.c.b16 %v850, %v846
    %v1059 = vpack.c.b16 %v851, %v847
    %v1060 = vpack.c.b16 %v852, %v848
    %v1061 = vpack.c.b16 %v853, %v849
    %v1062 = vpack.c.b16 %v858, %v854
    %v1063 = vpack.c.b16 %v859, %v855
    %v1064 = vpack.c.b16 %v860, %v856
    %v1065 = vpack.c.b16 %v861, %v857
    %v1066 = vpack.c.b16 %v866, %v862
    %v1067 = vpack.c.b16 %v867, %v863
    %v1068 = vpack.c.b16 %v868, %v864
    %v1069 = vpack.c.b16 %v869, %v865
    %v1070 = vpack.c.b16 %v874, %v870
    %v1071 = vpack.c.b16 %v875, %v871
    %v1072 = vpack.c.b16 %v876, %v872
    %v1073 = vpack.c.b16 %v877, %v873
    %v1074 = vpack.c.b16 %v882, %v878
    %v1075 = vpack.c.b16 %v883, %v879
    %v1076 = vpack.c.b16 %v884, %v880
    %v1077 = vpack.c.b16 %v885, %v881
    %1270 = vmatprep.subr.bf16.mxu0 %v887
    %1271 = vmatpush1.bf16.msra.mxu0 %v886
    %1272 = vmatprep.subr.bf16.mxu0 %v891
    %1273 = vmatpush1.bf16.msra.mxu0 %v890
    %1274 = vmatprep.subr.bf16.mxu0 %v895
    %1275 = vmatpush1.bf16.msra.mxu0 %v894
    %1276 = vmatprep.subr.bf16.mxu0 %v899
    %1277 = vmatpush1.bf16.msra.mxu0 %v898
    %1278 = vmatprep.subr.bf16.mxu0 %v903
    %1279 = vmatpush1.bf16.msra.mxu0 %v902
    %1280 = vmatprep.subr.bf16.mxu0 %v907
    %1281 = vmatpush1.bf16.msra.mxu0 %v906
    %1282 = vmatprep.subr.bf16.mxu0 %v911
    %1283 = vmatpush1.bf16.msra.mxu0 %v910
    %1284 = vmatprep.subr.bf16.mxu0 %v915
    %1285 = vmatpush1.bf16.msra.mxu0 %v914
    %1286 = vmatprep.subr.bf16.mxu0 %v919
    %1287 = vmatpush1.bf16.msra.mxu0 %v918
    %1288 = vmatprep.subr.bf16.mxu0 %v923
    %1289 = vmatpush1.bf16.msra.mxu0 %v922
    %1290 = vmatprep.subr.bf16.mxu0 %v927
    %1291 = vmatpush1.bf16.msra.mxu0 %v926
    %1292 = vmatprep.subr.bf16.mxu0 %v931
    %1293 = vmatpush1.bf16.msra.mxu0 %v930
    %1294 = vmatprep.subr.bf16.mxu0 %v935
    %1295 = vmatpush1.bf16.msra.mxu0 %v934
    %1296 = vmatprep.subr.bf16.mxu0 %v939
    %1297 = vmatpush1.bf16.msra.mxu0 %v938
    %1298 = vmatprep.subr.bf16.mxu0 %v943
    %1299 = vmatpush1.bf16.msra.mxu0 %v942
    %1300 = vmatprep.subr.bf16.mxu0 %v947
    %1301 = vmatpush1.bf16.msra.mxu0 %v946
    %1302 = vmatprep.mubr.bf16.mxu0 %v299
    %1303 = vmatmul.mubr.bf16.gmra.mrb[0].mxu0 %v298
    %v1304 = vpop.f32.mrb[0].mxu0
    %v1305 = vadd.f32 %v272, %v1304
    %v1306 = vpop.f32.mrb[0].mxu0
    %v1307 = vadd.f32 %v276, %v1306
    %v1308 = vpop.f32.mrb[0].mxu0
    %v1309 = vpop.f32.mrb[0].mxu0
    %1310 = vdwg.mxu0
    %1311 = vmatprep.subr.bf16.mxu0 %v951
    %1312 = vmatpush1.bf16.msra.mxu0 %v950
    %1313 = vmatprep.subr.bf16.mxu0 %v955
    %1314 = vmatpush1.bf16.msra.mxu0 %v954
    %1315 = vmatprep.subr.bf16.mxu0 %v959
    %1316 = vmatpush1.bf16.msra.mxu0 %v958
    %1317 = vmatprep.subr.bf16.mxu0 %v963
    %1318 = vmatpush1.bf16.msra.mxu0 %v962
    %1319 = vmatprep.subr.bf16.mxu0 %v967
    %1320 = vmatpush1.bf16.msra.mxu0 %v966
    %1321 = vmatprep.subr.bf16.mxu0 %v971
    %1322 = vmatpush1.bf16.msra.mxu0 %v970
    %1323 = vmatprep.subr.bf16.mxu0 %v975
    %1324 = vmatpush1.bf16.msra.mxu0 %v974
    %1325 = vmatprep.subr.bf16.mxu0 %v979
    %1326 = vmatpush1.bf16.msra.mxu0 %v978
    %1327 = vmatprep.subr.bf16.mxu0 %v983
    %1328 = vmatpush1.bf16.msra.mxu0 %v982
    %1329 = vmatprep.subr.bf16.mxu0 %v987
    %1330 = vmatpush1.bf16.msra.mxu0 %v986
    %1331 = vmatprep.subr.bf16.mxu0 %v991
    %1332 = vmatpush1.bf16.msra.mxu0 %v990
    %1333 = vmatprep.subr.bf16.mxu0 %v995
    %1334 = vmatpush1.bf16.msra.mxu0 %v994
    %1335 = vmatprep.subr.bf16.mxu0 %v999
    %1336 = vmatpush1.bf16.msra.mxu0 %v998
    %1337 = vmatprep.subr.bf16.mxu0 %v1003
    %1338 = vmatpush1.bf16.msra.mxu0 %v1002
    %1339 = vmatprep.subr.bf16.mxu0 %v1007
    %1340 = vmatpush1.bf16.msra.mxu0 %v1006
    %1341 = vmatprep.subr.bf16.mxu0 %v1011
    %1342 = vmatpush1.bf16.msra.mxu0 %v1010
    %1343 = vmatprep.mubr.bf16.mxu0 %v301
    %1344 = vmatmul.mubr.bf16.gmra.mrb[0].mxu0 %v300
    %v1345 = vpop.f32.mrb[0].mxu0
    %v1346 = vadd.f32 %v1305, %v1345
    %v1347 = vpop.f32.mrb[0].mxu0
    %v1348 = vadd.f32 %v1307, %v1347
    %v1349 = vpop.f32.mrb[0].mxu0
    %v1350 = vpop.f32.mrb[0].mxu0
    %1351 = vdwg.mxu0
    %1352 = vmatprep.subr.bf16.mxu0 %v1015
    %1353 = vmatpush1.bf16.msra.mxu0 %v1014
    %1354 = vmatprep.subr.bf16.mxu0 %v1019
    %1355 = vmatpush1.bf16.msra.mxu0 %v1018
    %1356 = vmatprep.subr.bf16.mxu0 %v1023
    %1357 = vmatpush1.bf16.msra.mxu0 %v1022
    %1358 = vmatprep.subr.bf16.mxu0 %v1027
    %1359 = vmatpush1.bf16.msra.mxu0 %v1026
    %1360 = vmatprep.subr.bf16.mxu0 %v1031
    %1361 = vmatpush1.bf16.msra.mxu0 %v1030
    %1362 = vmatprep.subr.bf16.mxu0 %v1035
    %1363 = vmatpush1.bf16.msra.mxu0 %v1034
    %1364 = vmatprep.subr.bf16.mxu0 %v1039
    %1365 = vmatpush1.bf16.msra.mxu0 %v1038
    %1366 = vmatprep.subr.bf16.mxu0 %v1043
    %1367 = vmatpush1.bf16.msra.mxu0 %v1042
    %1368 = vmatprep.subr.bf16.mxu0 %v1047
    %1369 = vmatpush1.bf16.msra.mxu0 %v1046
    %1370 = vmatprep.subr.bf16.mxu0 %v1051
    %1371 = vmatpush1.bf16.msra.mxu0 %v1050
    %1372 = vmatprep.subr.bf16.mxu0 %v1055
    %1373 = vmatpush1.bf16.msra.mxu0 %v1054
    %1374 = vmatprep.subr.bf16.mxu0 %v1059
    %1375 = vmatpush1.bf16.msra.mxu0 %v1058
    %1376 = vmatprep.subr.bf16.mxu0 %v1063
    %1377 = vmatpush1.bf16.msra.mxu0 %v1062
    %1378 = vmatprep.subr.bf16.mxu0 %v1067
    %1379 = vmatpush1.bf16.msra.mxu0 %v1066
    %1380 = vmatprep.subr.bf16.mxu0 %v1071
    %1381 = vmatpush1.bf16.msra.mxu0 %v1070
    %1382 = vmatprep.subr.bf16.mxu0 %v1075
    %1383 = vmatpush1.bf16.msra.mxu0 %v1074
    %1384 = vmatprep.mubr.bf16.mxu0 %v303
    %1385 = vmatmul.mubr.bf16.gmra.mrb[0].mxu0 %v302
    %v1386 = vpop.f32.mrb[0].mxu0
    %v1387 = vadd.f32 %v1346, %v1386
    %v1388 = vpop.f32.mrb[0].mxu0
    %v1389 = vadd.f32 %v1348, %v1388
    %v1390 = vpop.f32.mrb[0].mxu0
    %v1391 = vpop.f32.mrb[0].mxu0
    %1392 = vdwg.mxu0
    %1393 = vmatprep.subr.bf16.mxu0 %v889
    %1394 = vmatpush1.bf16.msra.mxu0 %v888
    %1395 = vmatprep.subr.bf16.mxu0 %v893
    %1396 = vmatpush1.bf16.msra.mxu0 %v892
    %1397 = vmatprep.subr.bf16.mxu0 %v897
    %1398 = vmatpush1.bf16.msra.mxu0 %v896
    %1399 = vmatprep.subr.bf16.mxu0 %v901
    %1400 = vmatpush1.bf16.msra.mxu0 %v900
    %1401 = vmatprep.subr.bf16.mxu0 %v905
    %1402 = vmatpush1.bf16.msra.mxu0 %v904
    %1403 = vmatprep.subr.bf16.mxu0 %v909
    %1404 = vmatpush1.bf16.msra.mxu0 %v908
    %1405 = vmatprep.subr.bf16.mxu0 %v913
    %1406 = vmatpush1.bf16.msra.mxu0 %v912
    %1407 = vmatprep.subr.bf16.mxu0 %v917
    %1408 = vmatpush1.bf16.msra.mxu0 %v916
    %1409 = vmatprep.subr.bf16.mxu0 %v921
    %1410 = vmatpush1.bf16.msra.mxu0 %v920
    %1411 = vmatprep.subr.bf16.mxu0 %v925
    %1412 = vmatpush1.bf16.msra.mxu0 %v924
    %1413 = vmatprep.subr.bf16.mxu0 %v929
    %1414 = vmatpush1.bf16.msra.mxu0 %v928
    %1415 = vmatprep.subr.bf16.mxu0 %v933
    %1416 = vmatpush1.bf16.msra.mxu0 %v932
    %1417 = vmatprep.subr.bf16.mxu0 %v937
    %1418 = vmatpush1.bf16.msra.mxu0 %v936
    %1419 = vmatprep.subr.bf16.mxu0 %v941
    %1420 = vmatpush1.bf16.msra.mxu0 %v940
    %1421 = vmatprep.subr.bf16.mxu0 %v945
    %1422 = vmatpush1.bf16.msra.mxu0 %v944
    %1423 = vmatprep.subr.bf16.mxu0 %v949
    %1424 = vmatpush1.bf16.msra.mxu0 %v948
    %1425 = vmatprep.mubr.bf16.mxu0 %v299
    %1426 = vmatmul.mubr.bf16.gmra.mrb[0].mxu0 %v298
    %v1427 = vpop.f32.mrb[0].mxu0
    %v1428 = vadd.f32 %v280, %v1427
    %v1429 = vpop.f32.mrb[0].mxu0
    %v1430 = vadd.f32 %v284, %v1429
    %v1431 = vpop.f32.mrb[0].mxu0
    %v1432 = vpop.f32.mrb[0].mxu0
    %1433 = vdwg.mxu0
    %1434 = vmatprep.subr.bf16.mxu0 %v953
    %1435 = vmatpush1.bf16.msra.mxu0 %v952
    %1436 = vmatprep.subr.bf16.mxu0 %v957
    %1437 = vmatpush1.bf16.msra.mxu0 %v956
    %1438 = vmatprep.subr.bf16.mxu0 %v961
    %1439 = vmatpush1.bf16.msra.mxu0 %v960
    %1440 = vmatprep.subr.bf16.mxu0 %v965
    %1441 = vmatpush1.bf16.msra.mxu0 %v964
    %1442 = vmatprep.subr.bf16.mxu0 %v969
    %1443 = vmatpush1.bf16.msra.mxu0 %v968
    %1444 = vmatprep.subr.bf16.mxu0 %v973
    %1445 = vmatpush1.bf16.msra.mxu0 %v972
    %1446 = vmatprep.subr.bf16.mxu0 %v977
    %1447 = vmatpush1.bf16.msra.mxu0 %v976
    %1448 = vmatprep.subr.bf16.mxu0 %v981
    %1449 = vmatpush1.bf16.msra.mxu0 %v980
    %1450 = vmatprep.subr.bf16.mxu0 %v985
    %1451 = vmatpush1.bf16.msra.mxu0 %v984
    %1452 = vmatprep.subr.bf16.mxu0 %v989
    %1453 = vmatpush1.bf16.msra.mxu0 %v988
    %1454 = vmatprep.subr.bf16.mxu0 %v993
    %1455 = vmatpush1.bf16.msra.mxu0 %v992
    %1456 = vmatprep.subr.bf16.mxu0 %v997
    %1457 = vmatpush1.bf16.msra.mxu0 %v996
    %1458 = vmatprep.subr.bf16.mxu0 %v1001
    %1459 = vmatpush1.bf16.msra.mxu0 %v1000
    %1460 = vmatprep.subr.bf16.mxu0 %v1005
    %1461 = vmatpush1.bf16.msra.mxu0 %v1004
    %1462 = vmatprep.subr.bf16.mxu0 %v1009
    %1463 = vmatpush1.bf16.msra.mxu0 %v1008
    %1464 = vmatprep.subr.bf16.mxu0 %v1013
    %1465 = vmatpush1.bf16.msra.mxu0 %v1012
    %1466 = vmatprep.mubr.bf16.mxu0 %v301
    %1467 = vmatmul.mubr.bf16.gmra.mrb[0].mxu0 %v300
    %v1468 = vpop.f32.mrb[0].mxu0
    %v1469 = vadd.f32 %v1428, %v1468
    %v1470 = vpop.f32.mrb[0].mxu0
    %v1471 = vadd.f32 %v1430, %v1470
    %v1472 = vpop.f32.mrb[0].mxu0
    %v1473 = vpop.f32.mrb[0].mxu0
    %1474 = vdwg.mxu0
    %1475 = vmatprep.subr.bf16.mxu0 %v1017
    %1476 = vmatpush1.bf16.msra.mxu0 %v1016
    %1477 = vmatprep.subr.bf16.mxu0 %v1021
    %1478 = vmatpush1.bf16.msra.mxu0 %v1020
    %1479 = vmatprep.subr.bf16.mxu0 %v1025
    %1480 = vmatpush1.bf16.msra.mxu0 %v1024
    %1481 = vmatprep.subr.bf16.mxu0 %v1029
    %1482 = vmatpush1.bf16.msra.mxu0 %v1028
    %1483 = vmatprep.subr.bf16.mxu0 %v1033
    %1484 = vmatpush1.bf16.msra.mxu0 %v1032
    %1485 = vmatprep.subr.bf16.mxu0 %v1037
    %1486 = vmatpush1.bf16.msra.mxu0 %v1036
    %1487 = vmatprep.subr.bf16.mxu0 %v1041
    %1488 = vmatpush1.bf16.msra.mxu0 %v1040
    %1489 = vmatprep.subr.bf16.mxu0 %v1045
    %1490 = vmatpush1.bf16.msra.mxu0 %v1044
    %1491 = vmatprep.subr.bf16.mxu0 %v1049
    %1492 = vmatpush1.bf16.msra.mxu0 %v1048
    %1493 = vmatprep.subr.bf16.mxu0 %v1053
    %1494 = vmatpush1.bf16.msra.mxu0 %v1052
    %1495 = vmatprep.subr.bf16.mxu0 %v1057
    %1496 = vmatpush1.bf16.msra.mxu0 %v1056
    %1497 = vmatprep.subr.bf16.mxu0 %v1061
    %1498 = vmatpush1.bf16.msra.mxu0 %v1060
    %1499 = vmatprep.subr.bf16.mxu0 %v1065
    %1500 = vmatpush1.bf16.msra.mxu0 %v1064
    %1501 = vmatprep.subr.bf16.mxu0 %v1069
    %1502 = vmatpush1.bf16.msra.mxu0 %v1068
    %1503 = vmatprep.subr.bf16.mxu0 %v1073
    %1504 = vmatpush1.bf16.msra.mxu0 %v1072
    %1505 = vmatprep.subr.bf16.mxu0 %v1077
    %1506 = vmatpush1.bf16.msra.mxu0 %v1076
    %1507 = vmatprep.mubr.bf16.mxu0 %v303
    %1508 = vmatmul.mubr.bf16.gmra.mrb[0].mxu0 %v302
    %v1509 = vpop.f32.mrb[0].mxu0
    %v1510 = vadd.f32 %v1469, %v1509
    %v1511 = vpop.f32.mrb[0].mxu0
    %v1512 = vadd.f32 %v1471, %v1511
    %v1513 = vpop.f32.mrb[0].mxu0
    %v1514 = vpop.f32.mrb[0].mxu0
    %1515 = vdwg.mxu0
    %v1516 = vmax.f32 %v1387, 0.0
    %v1517 = vmax.f32 %v1389, 0.0
    %v1518 = vmax.f32 %v1510, 0.0
    %v1519 = vmax.f32 %v1512, 0.0
    %v1520 = vpack.c.bf16 %v1516, %v1516
    %v1521 = vpack.c.bf16 %v1517, %v1517
    %v1522 = vpack.c.bf16 %v1518, %v1518
    %v1523 = vpack.c.bf16 %v1519, %v1519
    %v1524 = vld [vmem:[#allocation8] sm:$0xff]
    %v1525 = vld [vmem:[#allocation8 + $0x8] sm:$0xff]
    %v1526 = vld [vmem:[#allocation8 + $0x10] sm:$0xff]
    %v1527 = vld [vmem:[#allocation8 + $0x18] sm:$0xff]
    %v1528 = vld [vmem:[#allocation8 + $0x20] sm:$0xff]
    %v1529 = vld [vmem:[#allocation8 + $0x28] sm:$0xff]
    %v1530 = vld [vmem:[#allocation8 + $0x30] sm:$0xff]
    %v1531 = vld [vmem:[#allocation8 + $0x38] sm:$0xff]
    %v1532 = vld [vmem:[#allocation8 + $0x40] sm:$0xff]
    %v1533 = vld [vmem:[#allocation8 + $0x48] sm:$0xff]
    %v1534 = vld [vmem:[#allocation8 + $0x50] sm:$0xff]
    %v1535 = vld [vmem:[#allocation8 + $0x58] sm:$0xff]
    %v1536 = vld [vmem:[#allocation8 + $0x60] sm:$0xff]
    %v1537 = vld [vmem:[#allocation8 + $0x68] sm:$0xff]
    %v1538 = vld [vmem:[#allocation8 + $0x70] sm:$0xff]
    %v1539 = vld [vmem:[#allocation8 + $0x78] sm:$0xff]
    %v1540 = vld [vmem:[#allocation8 + $0x80] sm:$0xff]
    %v1541 = vld [vmem:[#allocation8 + $0x88] sm:$0xff]
    %v1542 = vld [vmem:[#allocation8 + $0x90] sm:$0xff]
    %v1543 = vld [vmem:[#allocation8 + $0x98] sm:$0xff]
    %v1544 = vld [vmem:[#allocation8 + $0xa0] sm:$0xff]
    %v1545 = vld [vmem:[#allocation8 + $0xa8] sm:$0xff]
    %v1546 = vld [vmem:[#allocation8 + $0xb0] sm:$0xff]
    %v1547 = vld [vmem:[#allocation8 + $0xb8] sm:$0xff]
    %v1548 = vld [vmem:[#allocation8 + $0xc0] sm:$0xff]
    %v1549 = vld [vmem:[#allocation8 + $0xc8] sm:$0xff]
    %v1550 = vld [vmem:[#allocation8 + $0xd0] sm:$0xff]
    %v1551 = vld [vmem:[#allocation8 + $0xd8] sm:$0xff]
    %v1552 = vld [vmem:[#allocation8 + $0xe0] sm:$0xff]
    %v1553 = vld [vmem:[#allocation8 + $0xe8] sm:$0xff]
    %v1554 = vld [vmem:[#allocation8 + $0xf0] sm:$0xff]
    %v1555 = vld [vmem:[#allocation8 + $0xf8] sm:$0xff]
    %v1556 = vld [vmem:[#allocation8 + $0x100] sm:$0xff]
    %v1557 = vld [vmem:[#allocation8 + $0x108] sm:$0xff]
    %v1558 = vld [vmem:[#allocation8 + $0x110] sm:$0xff]
    %v1559 = vld [vmem:[#allocation8 + $0x118] sm:$0xff]
    %v1560 = vld [vmem:[#allocation8 + $0x120] sm:$0xff]
    %v1561 = vld [vmem:[#allocation8 + $0x128] sm:$0xff]
    %v1562 = vld [vmem:[#allocation8 + $0x130] sm:$0xff]
    %v1563 = vld [vmem:[#allocation8 + $0x138] sm:$0xff]
    %v1564 = vld [vmem:[#allocation8 + $0x140] sm:$0xff]
    %v1565 = vld [vmem:[#allocation8 + $0x148] sm:$0xff]
    %v1566 = vld [vmem:[#allocation8 + $0x150] sm:$0xff]
    %v1567 = vld [vmem:[#allocation8 + $0x158] sm:$0xff]
    %v1568 = vld [vmem:[#allocation8 + $0x160] sm:$0xff]
    %v1569 = vld [vmem:[#allocation8 + $0x168] sm:$0xff]
    %v1570 = vld [vmem:[#allocation8 + $0x170] sm:$0xff]
    %v1571 = vld [vmem:[#allocation8 + $0x178] sm:$0xff]
    %v1572 = vld [vmem:[#allocation8 + $0x180] sm:$0xff]
    %v1573 = vld [vmem:[#allocation8 + $0x188] sm:$0xff]
    %v1574 = vld [vmem:[#allocation8 + $0x190] sm:$0xff]
    %v1575 = vld [vmem:[#allocation8 + $0x198] sm:$0xff]
    %v1576 = vld [vmem:[#allocation8 + $0x1a0] sm:$0xff]
    %v1577 = vld [vmem:[#allocation8 + $0x1a8] sm:$0xff]
    %v1578 = vld [vmem:[#allocation8 + $0x1b0] sm:$0xff]
    %v1579 = vld [vmem:[#allocation8 + $0x1b8] sm:$0xff]
    %v1580 = vld [vmem:[#allocation8 + $0x1c0] sm:$0xff]
    %v1581 = vld [vmem:[#allocation8 + $0x1c8] sm:$0xff]
    %v1582 = vld [vmem:[#allocation8 + $0x1d0] sm:$0xff]
    %v1583 = vld [vmem:[#allocation8 + $0x1d8] sm:$0xff]
    %v1584 = vld [vmem:[#allocation8 + $0x1e0] sm:$0xff]
    %v1585 = vld [vmem:[#allocation8 + $0x1e8] sm:$0xff]
    %v1586 = vld [vmem:[#allocation8 + $0x1f0] sm:$0xff]
    %v1587 = vld [vmem:[#allocation8 + $0x1f8] sm:$0xff]
    %v1588 = vld [vmem:[#allocation8 + $0x200] sm:$0xff]
    %v1589 = vld [vmem:[#allocation8 + $0x208] sm:$0xff]
    %v1590 = vld [vmem:[#allocation8 + $0x210] sm:$0xff]
    %v1591 = vld [vmem:[#allocation8 + $0x218] sm:$0xff]
    %v1592 = vld [vmem:[#allocation8 + $0x220] sm:$0xff]
    %v1593 = vld [vmem:[#allocation8 + $0x228] sm:$0xff]
    %v1594 = vld [vmem:[#allocation8 + $0x230] sm:$0xff]
    %v1595 = vld [vmem:[#allocation8 + $0x238] sm:$0xff]
    %v1596 = vld [vmem:[#allocation8 + $0x240] sm:$0xff]
    %v1597 = vld [vmem:[#allocation8 + $0x248] sm:$0xff]
    %v1598 = vld [vmem:[#allocation8 + $0x250] sm:$0xff]
    %v1599 = vld [vmem:[#allocation8 + $0x258] sm:$0xff]
    %v1600 = vld [vmem:[#allocation8 + $0x260] sm:$0xff]
    %v1601 = vld [vmem:[#allocation8 + $0x268] sm:$0xff]
    %v1602 = vld [vmem:[#allocation8 + $0x270] sm:$0xff]
    %v1603 = vld [vmem:[#allocation8 + $0x278] sm:$0xff]
    %v1604 = vld [vmem:[#allocation8 + $0x280] sm:$0xff]
    %v1605 = vld [vmem:[#allocation8 + $0x288] sm:$0xff]
    %v1606 = vld [vmem:[#allocation8 + $0x290] sm:$0xff]
    %v1607 = vld [vmem:[#allocation8 + $0x298] sm:$0xff]
    %v1608 = vld [vmem:[#allocation8 + $0x2a0] sm:$0xff]
    %v1609 = vld [vmem:[#allocation8 + $0x2a8] sm:$0xff]
    %v1610 = vld [vmem:[#allocation8 + $0x2b0] sm:$0xff]
    %v1611 = vld [vmem:[#allocation8 + $0x2b8] sm:$0xff]
    %v1612 = vld [vmem:[#allocation8 + $0x2c0] sm:$0xff]
    %v1613 = vld [vmem:[#allocation8 + $0x2c8] sm:$0xff]
    %v1614 = vld [vmem:[#allocation8 + $0x2d0] sm:$0xff]
    %v1615 = vld [vmem:[#allocation8 + $0x2d8] sm:$0xff]
    %v1616 = vld [vmem:[#allocation8 + $0x2e0] sm:$0xff]
    %v1617 = vld [vmem:[#allocation8 + $0x2e8] sm:$0xff]
    %v1618 = vld [vmem:[#allocation8 + $0x2f0] sm:$0xff]
    %v1619 = vld [vmem:[#allocation8 + $0x2f8] sm:$0xff]
    %v1620 = vld [vmem:[#allocation8 + $0x300] sm:$0xff]
    %v1621 = vld [vmem:[#allocation8 + $0x308] sm:$0xff]
    %v1622 = vld [vmem:[#allocation8 + $0x310] sm:$0xff]
    %v1623 = vld [vmem:[#allocation8 + $0x318] sm:$0xff]
    %v1624 = vld [vmem:[#allocation8 + $0x320] sm:$0xff]
    %v1625 = vld [vmem:[#allocation8 + $0x328] sm:$0xff]
    %v1626 = vld [vmem:[#allocation8 + $0x330] sm:$0xff]
    %v1627 = vld [vmem:[#allocation8 + $0x338] sm:$0xff]
    %v1628 = vld [vmem:[#allocation8 + $0x340] sm:$0xff]
    %v1629 = vld [vmem:[#allocation8 + $0x348] sm:$0xff]
    %v1630 = vld [vmem:[#allocation8 + $0x350] sm:$0xff]
    %v1631 = vld [vmem:[#allocation8 + $0x358] sm:$0xff]
    %v1632 = vld [vmem:[#allocation8 + $0x360] sm:$0xff]
    %v1633 = vld [vmem:[#allocation8 + $0x368] sm:$0xff]
    %v1634 = vld [vmem:[#allocation8 + $0x370] sm:$0xff]
    %v1635 = vld [vmem:[#allocation8 + $0x378] sm:$0xff]
    %v1636 = vld [vmem:[#allocation8 + $0x380] sm:$0xff]
    %v1637 = vld [vmem:[#allocation8 + $0x388] sm:$0xff]
    %v1638 = vld [vmem:[#allocation8 + $0x390] sm:$0xff]
    %v1639 = vld [vmem:[#allocation8 + $0x398] sm:$0xff]
    %v1640 = vld [vmem:[#allocation8 + $0x3a0] sm:$0xff]
    %v1641 = vld [vmem:[#allocation8 + $0x3a8] sm:$0xff]
    %v1642 = vld [vmem:[#allocation8 + $0x3b0] sm:$0xff]
    %v1643 = vld [vmem:[#allocation8 + $0x3b8] sm:$0xff]
    %v1644 = vld [vmem:[#allocation8 + $0x3c0] sm:$0xff]
    %v1645 = vld [vmem:[#allocation8 + $0x3c8] sm:$0xff]
    %v1646 = vld [vmem:[#allocation8 + $0x3d0] sm:$0xff]
    %v1647 = vld [vmem:[#allocation8 + $0x3d8] sm:$0xff]
    %v1648 = vld [vmem:[#allocation8 + $0x3e0] sm:$0xff]
    %v1649 = vld [vmem:[#allocation8 + $0x3e8] sm:$0xff]
    %v1650 = vld [vmem:[#allocation8 + $0x3f0] sm:$0xff]
    %v1651 = vld [vmem:[#allocation8 + $0x3f8] sm:$0xff]
    %s1652 = scalar_lea.vmem [#allocation7], 1
    %v1653 = vld [vmem:[%s1652] ss:$4 sm:$0xf]
    %v1655 = vlaneseq
    %v1656 = vshrl.u32 %v1655, 7
    %v1657 = vsub.s32 0, %v1656
    %v1658 = vrot.slane %v1653, %v1657
    %v1659 = vlaneseq
    %v1660 = vshrl.u32 %v1659, 7
    %v1661 = vsub.s32 1, %v1660
    %v1662 = vrot.slane %v1653, %v1661
    %v1663 = vlaneseq
    %v1664 = vshrl.u32 %v1663, 7
    %v1665 = vsub.s32 2, %v1664
    %v1666 = vrot.slane %v1653, %v1665
    %v1667 = vlaneseq
    %v1668 = vshrl.u32 %v1667, 7
    %v1669 = vsub.s32 3, %v1668
    %v1670 = vrot.slane %v1653, %v1669
    %v1803 = vunpack.c.l.b16 %v1524
    %v1804 = vunpack.c.h.b16 %v1524
    %v1805 = vunpack.c.l.b16 %v1525
    %v1806 = vunpack.c.h.b16 %v1525
    %v1807 = vunpack.c.l.b16 %v1526
    %v1808 = vunpack.c.h.b16 %v1526
    %v1809 = vunpack.c.l.b16 %v1527
    %v1810 = vunpack.c.h.b16 %v1527
    %v1811 = vunpack.c.l.b16 %v1528
    %v1812 = vunpack.c.h.b16 %v1528
    %v1813 = vunpack.c.l.b16 %v1529
    %v1814 = vunpack.c.h.b16 %v1529
    %v1815 = vunpack.c.l.b16 %v1530
    %v1816 = vunpack.c.h.b16 %v1530
    %v1817 = vunpack.c.l.b16 %v1531
    %v1818 = vunpack.c.h.b16 %v1531
    %v1819 = vunpack.c.l.b16 %v1532
    %v1820 = vunpack.c.h.b16 %v1532
    %v1821 = vunpack.c.l.b16 %v1533
    %v1822 = vunpack.c.h.b16 %v1533
    %v1823 = vunpack.c.l.b16 %v1534
    %v1824 = vunpack.c.h.b16 %v1534
    %v1825 = vunpack.c.l.b16 %v1535
    %v1826 = vunpack.c.h.b16 %v1535
    %v1827 = vunpack.c.l.b16 %v1536
    %v1828 = vunpack.c.h.b16 %v1536
    %v1829 = vunpack.c.l.b16 %v1537
    %v1830 = vunpack.c.h.b16 %v1537
    %v1831 = vunpack.c.l.b16 %v1538
    %v1832 = vunpack.c.h.b16 %v1538
    %v1833 = vunpack.c.l.b16 %v1539
    %v1834 = vunpack.c.h.b16 %v1539
    %v1835 = vunpack.c.l.b16 %v1540
    %v1836 = vunpack.c.h.b16 %v1540
    %v1837 = vunpack.c.l.b16 %v1541
    %v1838 = vunpack.c.h.b16 %v1541
    %v1839 = vunpack.c.l.b16 %v1542
    %v1840 = vunpack.c.h.b16 %v1542
    %v1841 = vunpack.c.l.b16 %v1543
    %v1842 = vunpack.c.h.b16 %v1543
    %v1843 = vunpack.c.l.b16 %v1544
    %v1844 = vunpack.c.h.b16 %v1544
    %v1845 = vunpack.c.l.b16 %v1545
    %v1846 = vunpack.c.h.b16 %v1545
    %v1847 = vunpack.c.l.b16 %v1546
    %v1848 = vunpack.c.h.b16 %v1546
    %v1849 = vunpack.c.l.b16 %v1547
    %v1850 = vunpack.c.h.b16 %v1547
    %v1851 = vunpack.c.l.b16 %v1548
    %v1852 = vunpack.c.h.b16 %v1548
    %v1853 = vunpack.c.l.b16 %v1549
    %v1854 = vunpack.c.h.b16 %v1549
    %v1855 = vunpack.c.l.b16 %v1550
    %v1856 = vunpack.c.h.b16 %v1550
    %v1857 = vunpack.c.l.b16 %v1551
    %v1858 = vunpack.c.h.b16 %v1551
    %v1859 = vunpack.c.l.b16 %v1552
    %v1860 = vunpack.c.h.b16 %v1552
    %v1861 = vunpack.c.l.b16 %v1553
    %v1862 = vunpack.c.h.b16 %v1553
    %v1863 = vunpack.c.l.b16 %v1554
    %v1864 = vunpack.c.h.b16 %v1554
    %v1865 = vunpack.c.l.b16 %v1555
    %v1866 = vunpack.c.h.b16 %v1555
    %v1867 = vunpack.c.l.b16 %v1556
    %v1868 = vunpack.c.h.b16 %v1556
    %v1869 = vunpack.c.l.b16 %v1557
    %v1870 = vunpack.c.h.b16 %v1557
    %v1871 = vunpack.c.l.b16 %v1558
    %v1872 = vunpack.c.h.b16 %v1558
    %v1873 = vunpack.c.l.b16 %v1559
    %v1874 = vunpack.c.h.b16 %v1559
    %v1875 = vunpack.c.l.b16 %v1560
    %v1876 = vunpack.c.h.b16 %v1560
    %v1877 = vunpack.c.l.b16 %v1561
    %v1878 = vunpack.c.h.b16 %v1561
    %v1879 = vunpack.c.l.b16 %v1562
    %v1880 = vunpack.c.h.b16 %v1562
    %v1881 = vunpack.c.l.b16 %v1563
    %v1882 = vunpack.c.h.b16 %v1563
    %v1883 = vunpack.c.l.b16 %v1564
    %v1884 = vunpack.c.h.b16 %v1564
    %v1885 = vunpack.c.l.b16 %v1565
    %v1886 = vunpack.c.h.b16 %v1565
    %v1887 = vunpack.c.l.b16 %v1566
    %v1888 = vunpack.c.h.b16 %v1566
    %v1889 = vunpack.c.l.b16 %v1567
    %v1890 = vunpack.c.h.b16 %v1567
    %v1891 = vunpack.c.l.b16 %v1568
    %v1892 = vunpack.c.h.b16 %v1568
    %v1893 = vunpack.c.l.b16 %v1569
    %v1894 = vunpack.c.h.b16 %v1569
    %v1895 = vunpack.c.l.b16 %v1570
    %v1896 = vunpack.c.h.b16 %v1570
    %v1897 = vunpack.c.l.b16 %v1571
    %v1898 = vunpack.c.h.b16 %v1571
    %v1899 = vunpack.c.l.b16 %v1572
    %v1900 = vunpack.c.h.b16 %v1572
    %v1901 = vunpack.c.l.b16 %v1573
    %v1902 = vunpack.c.h.b16 %v1573
    %v1903 = vunpack.c.l.b16 %v1574
    %v1904 = vunpack.c.h.b16 %v1574
    %v1905 = vunpack.c.l.b16 %v1575
    %v1906 = vunpack.c.h.b16 %v1575
    %v1907 = vunpack.c.l.b16 %v1576
    %v1908 = vunpack.c.h.b16 %v1576
    %v1909 = vunpack.c.l.b16 %v1577
    %v1910 = vunpack.c.h.b16 %v1577
    %v1911 = vunpack.c.l.b16 %v1578
    %v1912 = vunpack.c.h.b16 %v1578
    %v1913 = vunpack.c.l.b16 %v1579
    %v1914 = vunpack.c.h.b16 %v1579
    %v1915 = vunpack.c.l.b16 %v1580
    %v1916 = vunpack.c.h.b16 %v1580
    %v1917 = vunpack.c.l.b16 %v1581
    %v1918 = vunpack.c.h.b16 %v1581
    %v1919 = vunpack.c.l.b16 %v1582
    %v1920 = vunpack.c.h.b16 %v1582
    %v1921 = vunpack.c.l.b16 %v1583
    %v1922 = vunpack.c.h.b16 %v1583
    %v1923 = vunpack.c.l.b16 %v1584
    %v1924 = vunpack.c.h.b16 %v1584
    %v1925 = vunpack.c.l.b16 %v1585
    %v1926 = vunpack.c.h.b16 %v1585
    %v1927 = vunpack.c.l.b16 %v1586
    %v1928 = vunpack.c.h.b16 %v1586
    %v1929 = vunpack.c.l.b16 %v1587
    %v1930 = vunpack.c.h.b16 %v1587
    %v1931 = vunpack.c.l.b16 %v1588
    %v1932 = vunpack.c.h.b16 %v1588
    %v1933 = vunpack.c.l.b16 %v1589
    %v1934 = vunpack.c.h.b16 %v1589
    %v1935 = vunpack.c.l.b16 %v1590
    %v1936 = vunpack.c.h.b16 %v1590
    %v1937 = vunpack.c.l.b16 %v1591
    %v1938 = vunpack.c.h.b16 %v1591
    %v1939 = vunpack.c.l.b16 %v1592
    %v1940 = vunpack.c.h.b16 %v1592
    %v1941 = vunpack.c.l.b16 %v1593
    %v1942 = vunpack.c.h.b16 %v1593
    %v1943 = vunpack.c.l.b16 %v1594
    %v1944 = vunpack.c.h.b16 %v1594
    %v1945 = vunpack.c.l.b16 %v1595
    %v1946 = vunpack.c.h.b16 %v1595
    %v1947 = vunpack.c.l.b16 %v1596
    %v1948 = vunpack.c.h.b16 %v1596
    %v1949 = vunpack.c.l.b16 %v1597
    %v1950 = vunpack.c.h.b16 %v1597
    %v1951 = vunpack.c.l.b16 %v1598
    %v1952 = vunpack.c.h.b16 %v1598
    %v1953 = vunpack.c.l.b16 %v1599
    %v1954 = vunpack.c.h.b16 %v1599
    %v1955 = vunpack.c.l.b16 %v1600
    %v1956 = vunpack.c.h.b16 %v1600
    %v1957 = vunpack.c.l.b16 %v1601
    %v1958 = vunpack.c.h.b16 %v1601
    %v1959 = vunpack.c.l.b16 %v1602
    %v1960 = vunpack.c.h.b16 %v1602
    %v1961 = vunpack.c.l.b16 %v1603
    %v1962 = vunpack.c.h.b16 %v1603
    %v1963 = vunpack.c.l.b16 %v1604
    %v1964 = vunpack.c.h.b16 %v1604
    %v1965 = vunpack.c.l.b16 %v1605
    %v1966 = vunpack.c.h.b16 %v1605
    %v1967 = vunpack.c.l.b16 %v1606
    %v1968 = vunpack.c.h.b16 %v1606
    %v1969 = vunpack.c.l.b16 %v1607
    %v1970 = vunpack.c.h.b16 %v1607
    %v1971 = vunpack.c.l.b16 %v1608
    %v1972 = vunpack.c.h.b16 %v1608
    %v1973 = vunpack.c.l.b16 %v1609
    %v1974 = vunpack.c.h.b16 %v1609
    %v1975 = vunpack.c.l.b16 %v1610
    %v1976 = vunpack.c.h.b16 %v1610
    %v1977 = vunpack.c.l.b16 %v1611
    %v1978 = vunpack.c.h.b16 %v1611
    %v1979 = vunpack.c.l.b16 %v1612
    %v1980 = vunpack.c.h.b16 %v1612
    %v1981 = vunpack.c.l.b16 %v1613
    %v1982 = vunpack.c.h.b16 %v1613
    %v1983 = vunpack.c.l.b16 %v1614
    %v1984 = vunpack.c.h.b16 %v1614
    %v1985 = vunpack.c.l.b16 %v1615
    %v1986 = vunpack.c.h.b16 %v1615
    %v1987 = vunpack.c.l.b16 %v1616
    %v1988 = vunpack.c.h.b16 %v1616
    %v1989 = vunpack.c.l.b16 %v1617
    %v1990 = vunpack.c.h.b16 %v1617
    %v1991 = vunpack.c.l.b16 %v1618
    %v1992 = vunpack.c.h.b16 %v1618
    %v1993 = vunpack.c.l.b16 %v1619
    %v1994 = vunpack.c.h.b16 %v1619
    %v1995 = vunpack.c.l.b16 %v1620
    %v1996 = vunpack.c.h.b16 %v1620
    %v1997 = vunpack.c.l.b16 %v1621
    %v1998 = vunpack.c.h.b16 %v1621
    %v1999 = vunpack.c.l.b16 %v1622
    %v2000 = vunpack.c.h.b16 %v1622
    %v2001 = vunpack.c.l.b16 %v1623
    %v2002 = vunpack.c.h.b16 %v1623
    %v2003 = vunpack.c.l.b16 %v1624
    %v2004 = vunpack.c.h.b16 %v1624
    %v2005 = vunpack.c.l.b16 %v1625
    %v2006 = vunpack.c.h.b16 %v1625
    %v2007 = vunpack.c.l.b16 %v1626
    %v2008 = vunpack.c.h.b16 %v1626
    %v2009 = vunpack.c.l.b16 %v1627
    %v2010 = vunpack.c.h.b16 %v1627
    %v2011 = vunpack.c.l.b16 %v1628
    %v2012 = vunpack.c.h.b16 %v1628
    %v2013 = vunpack.c.l.b16 %v1629
    %v2014 = vunpack.c.h.b16 %v1629
    %v2015 = vunpack.c.l.b16 %v1630
    %v2016 = vunpack.c.h.b16 %v1630
    %v2017 = vunpack.c.l.b16 %v1631
    %v2018 = vunpack.c.h.b16 %v1631
    %v2019 = vunpack.c.l.b16 %v1632
    %v2020 = vunpack.c.h.b16 %v1632
    %v2021 = vunpack.c.l.b16 %v1633
    %v2022 = vunpack.c.h.b16 %v1633
    %v2023 = vunpack.c.l.b16 %v1634
    %v2024 = vunpack.c.h.b16 %v1634
    %v2025 = vunpack.c.l.b16 %v1635
    %v2026 = vunpack.c.h.b16 %v1635
    %v2027 = vunpack.c.l.b16 %v1636
    %v2028 = vunpack.c.h.b16 %v1636
    %v2029 = vunpack.c.l.b16 %v1637
    %v2030 = vunpack.c.h.b16 %v1637
    %v2031 = vunpack.c.l.b16 %v1638
    %v2032 = vunpack.c.h.b16 %v1638
    %v2033 = vunpack.c.l.b16 %v1639
    %v2034 = vunpack.c.h.b16 %v1639
    %v2035 = vunpack.c.l.b16 %v1640
    %v2036 = vunpack.c.h.b16 %v1640
    %v2037 = vunpack.c.l.b16 %v1641
    %v2038 = vunpack.c.h.b16 %v1641
    %v2039 = vunpack.c.l.b16 %v1642
    %v2040 = vunpack.c.h.b16 %v1642
    %v2041 = vunpack.c.l.b16 %v1643
    %v2042 = vunpack.c.h.b16 %v1643
    %v2043 = vunpack.c.l.b16 %v1644
    %v2044 = vunpack.c.h.b16 %v1644
    %v2045 = vunpack.c.l.b16 %v1645
    %v2046 = vunpack.c.h.b16 %v1645
    %v2047 = vunpack.c.l.b16 %v1646
    %v2048 = vunpack.c.h.b16 %v1646
    %v2049 = vunpack.c.l.b16 %v1647
    %v2050 = vunpack.c.h.b16 %v1647
    %v2051 = vunpack.c.l.b16 %v1648
    %v2052 = vunpack.c.h.b16 %v1648
    %v2053 = vunpack.c.l.b16 %v1649
    %v2054 = vunpack.c.h.b16 %v1649
    %v2055 = vunpack.c.l.b16 %v1650
    %v2056 = vunpack.c.h.b16 %v1650
    %v2057 = vunpack.c.l.b16 %v1651
    %v2058 = vunpack.c.h.b16 %v1651
    %v2059 = vpack.c.b16 %v1807, %v1803
    %v2060 = vpack.c.b16 %v1808, %v1804
    %v2061 = vpack.c.b16 %v1809, %v1805
    %v2062 = vpack.c.b16 %v1810, %v1806
    %v2063 = vpack.c.b16 %v1815, %v1811
    %v2064 = vpack.c.b16 %v1816, %v1812
    %v2065 = vpack.c.b16 %v1817, %v1813
    %v2066 = vpack.c.b16 %v1818, %v1814
    %v2067 = vpack.c.b16 %v1823, %v1819
    %v2068 = vpack.c.b16 %v1824, %v1820
    %v2069 = vpack.c.b16 %v1825, %v1821
    %v2070 = vpack.c.b16 %v1826, %v1822
    %v2071 = vpack.c.b16 %v1831, %v1827
    %v2072 = vpack.c.b16 %v1832, %v1828
    %v2073 = vpack.c.b16 %v1833, %v1829
    %v2074 = vpack.c.b16 %v1834, %v1830
    %v2075 = vpack.c.b16 %v1839, %v1835
    %v2076 = vpack.c.b16 %v1840, %v1836
    %v2077 = vpack.c.b16 %v1841, %v1837
    %v2078 = vpack.c.b16 %v1842, %v1838
    %v2079 = vpack.c.b16 %v1847, %v1843
    %v2080 = vpack.c.b16 %v1848, %v1844
    %v2081 = vpack.c.b16 %v1849, %v1845
    %v2082 = vpack.c.b16 %v1850, %v1846
    %v2083 = vpack.c.b16 %v1855, %v1851
    %v2084 = vpack.c.b16 %v1856, %v1852
    %v2085 = vpack.c.b16 %v1857, %v1853
    %v2086 = vpack.c.b16 %v1858, %v1854
    %v2087 = vpack.c.b16 %v1863, %v1859
    %v2088 = vpack.c.b16 %v1864, %v1860
    %v2089 = vpack.c.b16 %v1865, %v1861
    %v2090 = vpack.c.b16 %v1866, %v1862
    %v2091 = vpack.c.b16 %v1871, %v1867
    %v2092 = vpack.c.b16 %v1872, %v1868
    %v2093 = vpack.c.b16 %v1873, %v1869
    %v2094 = vpack.c.b16 %v1874, %v1870
    %v2095 = vpack.c.b16 %v1879, %v1875
    %v2096 = vpack.c.b16 %v1880, %v1876
    %v2097 = vpack.c.b16 %v1881, %v1877
    %v2098 = vpack.c.b16 %v1882, %v1878
    %v2099 = vpack.c.b16 %v1887, %v1883
    %v2100 = vpack.c.b16 %v1888, %v1884
    %v2101 = vpack.c.b16 %v1889, %v1885
    %v2102 = vpack.c.b16 %v1890, %v1886
    %v2103 = vpack.c.b16 %v1895, %v1891
    %v2104 = vpack.c.b16 %v1896, %v1892
    %v2105 = vpack.c.b16 %v1897, %v1893
    %v2106 = vpack.c.b16 %v1898, %v1894
    %v2107 = vpack.c.b16 %v1903, %v1899
    %v2108 = vpack.c.b16 %v1904, %v1900
    %v2109 = vpack.c.b16 %v1905, %v1901
    %v2110 = vpack.c.b16 %v1906, %v1902
    %v2111 = vpack.c.b16 %v1911, %v1907
    %v2112 = vpack.c.b16 %v1912, %v1908
    %v2113 = vpack.c.b16 %v1913, %v1909
    %v2114 = vpack.c.b16 %v1914, %v1910
    %v2115 = vpack.c.b16 %v1919, %v1915
    %v2116 = vpack.c.b16 %v1920, %v1916
    %v2117 = vpack.c.b16 %v1921, %v1917
    %v2118 = vpack.c.b16 %v1922, %v1918
    %v2119 = vpack.c.b16 %v1927, %v1923
    %v2120 = vpack.c.b16 %v1928, %v1924
    %v2121 = vpack.c.b16 %v1929, %v1925
    %v2122 = vpack.c.b16 %v1930, %v1926
    %v2123 = vpack.c.b16 %v1935, %v1931
    %v2124 = vpack.c.b16 %v1936, %v1932
    %v2125 = vpack.c.b16 %v1937, %v1933
    %v2126 = vpack.c.b16 %v1938, %v1934
    %v2127 = vpack.c.b16 %v1943, %v1939
    %v2128 = vpack.c.b16 %v1944, %v1940
    %v2129 = vpack.c.b16 %v1945, %v1941
    %v2130 = vpack.c.b16 %v1946, %v1942
    %v2131 = vpack.c.b16 %v1951, %v1947
    %v2132 = vpack.c.b16 %v1952, %v1948
    %v2133 = vpack.c.b16 %v1953, %v1949
    %v2134 = vpack.c.b16 %v1954, %v1950
    %v2135 = vpack.c.b16 %v1959, %v1955
    %v2136 = vpack.c.b16 %v1960, %v1956
    %v2137 = vpack.c.b16 %v1961, %v1957
    %v2138 = vpack.c.b16 %v1962, %v1958
    %v2139 = vpack.c.b16 %v1967, %v1963
    %v2140 = vpack.c.b16 %v1968, %v1964
    %v2141 = vpack.c.b16 %v1969, %v1965
    %v2142 = vpack.c.b16 %v1970, %v1966
    %v2143 = vpack.c.b16 %v1975, %v1971
    %v2144 = vpack.c.b16 %v1976, %v1972
    %v2145 = vpack.c.b16 %v1977, %v1973
    %v2146 = vpack.c.b16 %v1978, %v1974
    %v2147 = vpack.c.b16 %v1983, %v1979
    %v2148 = vpack.c.b16 %v1984, %v1980
    %v2149 = vpack.c.b16 %v1985, %v1981
    %v2150 = vpack.c.b16 %v1986, %v1982
    %v2151 = vpack.c.b16 %v1991, %v1987
    %v2152 = vpack.c.b16 %v1992, %v1988
    %v2153 = vpack.c.b16 %v1993, %v1989
    %v2154 = vpack.c.b16 %v1994, %v1990
    %v2155 = vpack.c.b16 %v1999, %v1995
    %v2156 = vpack.c.b16 %v2000, %v1996
    %v2157 = vpack.c.b16 %v2001, %v1997
    %v2158 = vpack.c.b16 %v2002, %v1998
    %v2159 = vpack.c.b16 %v2007, %v2003
    %v2160 = vpack.c.b16 %v2008, %v2004
    %v2161 = vpack.c.b16 %v2009, %v2005
    %v2162 = vpack.c.b16 %v2010, %v2006
    %v2163 = vpack.c.b16 %v2015, %v2011
    %v2164 = vpack.c.b16 %v2016, %v2012
    %v2165 = vpack.c.b16 %v2017, %v2013
    %v2166 = vpack.c.b16 %v2018, %v2014
    %v2167 = vpack.c.b16 %v2023, %v2019
    %v2168 = vpack.c.b16 %v2024, %v2020
    %v2169 = vpack.c.b16 %v2025, %v2021
    %v2170 = vpack.c.b16 %v2026, %v2022
    %v2171 = vpack.c.b16 %v2031, %v2027
    %v2172 = vpack.c.b16 %v2032, %v2028
    %v2173 = vpack.c.b16 %v2033, %v2029
    %v2174 = vpack.c.b16 %v2034, %v2030
    %v2175 = vpack.c.b16 %v2039, %v2035
    %v2176 = vpack.c.b16 %v2040, %v2036
    %v2177 = vpack.c.b16 %v2041, %v2037
    %v2178 = vpack.c.b16 %v2042, %v2038
    %v2179 = vpack.c.b16 %v2047, %v2043
    %v2180 = vpack.c.b16 %v2048, %v2044
    %v2181 = vpack.c.b16 %v2049, %v2045
    %v2182 = vpack.c.b16 %v2050, %v2046
    %v2183 = vpack.c.b16 %v2055, %v2051
    %v2184 = vpack.c.b16 %v2056, %v2052
    %v2185 = vpack.c.b16 %v2057, %v2053
    %v2186 = vpack.c.b16 %v2058, %v2054
    %2315 = vmatprep.subr.bf16.mxu0 %v2060
    %2316 = vmatpush1.bf16.msra.mxu0 %v2059
    %2317 = vmatprep.subr.bf16.mxu0 %v2064
    %2318 = vmatpush1.bf16.msra.mxu0 %v2063
    %2319 = vmatprep.subr.bf16.mxu0 %v2068
    %2320 = vmatpush1.bf16.msra.mxu0 %v2067
    %2321 = vmatprep.subr.bf16.mxu0 %v2072
    %2322 = vmatpush1.bf16.msra.mxu0 %v2071
    %2323 = vmatprep.subr.bf16.mxu0 %v2076
    %2324 = vmatpush1.bf16.msra.mxu0 %v2075
    %2325 = vmatprep.subr.bf16.mxu0 %v2080
    %2326 = vmatpush1.bf16.msra.mxu0 %v2079
    %2327 = vmatprep.subr.bf16.mxu0 %v2084
    %2328 = vmatpush1.bf16.msra.mxu0 %v2083
    %2329 = vmatprep.subr.bf16.mxu0 %v2088
    %2330 = vmatpush1.bf16.msra.mxu0 %v2087
    %2331 = vmatprep.subr.bf16.mxu0 %v2092
    %2332 = vmatpush1.bf16.msra.mxu0 %v2091
    %2333 = vmatprep.subr.bf16.mxu0 %v2096
    %2334 = vmatpush1.bf16.msra.mxu0 %v2095
    %2335 = vmatprep.subr.bf16.mxu0 %v2100
    %2336 = vmatpush1.bf16.msra.mxu0 %v2099
    %2337 = vmatprep.subr.bf16.mxu0 %v2104
    %2338 = vmatpush1.bf16.msra.mxu0 %v2103
    %2339 = vmatprep.subr.bf16.mxu0 %v2108
    %2340 = vmatpush1.bf16.msra.mxu0 %v2107
    %2341 = vmatprep.subr.bf16.mxu0 %v2112
    %2342 = vmatpush1.bf16.msra.mxu0 %v2111
    %2343 = vmatprep.subr.bf16.mxu0 %v2116
    %2344 = vmatpush1.bf16.msra.mxu0 %v2115
    %2345 = vmatprep.subr.bf16.mxu0 %v2120
    %2346 = vmatpush1.bf16.msra.mxu0 %v2119
    %2347 = vmatprep.mubr.bf16.mxu0 %v1521
    %2348 = vmatmul.mubr.bf16.gmra.mrb[0].mxu0 %v1520
    %v2349 = vpop.f32.mrb[0].mxu0
    %v2350 = vadd.f32 %v1658, %v2349
    %v2351 = vpop.f32.mrb[0].mxu0
    %v2352 = vadd.f32 %v1662, %v2351
    %v2353 = vpop.f32.mrb[0].mxu0
    %v2354 = vpop.f32.mrb[0].mxu0
    %2355 = vdwg.mxu0
    %2356 = vmatprep.subr.bf16.mxu0 %v2124
    %2357 = vmatpush1.bf16.msra.mxu0 %v2123
    %2358 = vmatprep.subr.bf16.mxu0 %v2128
    %2359 = vmatpush1.bf16.msra.mxu0 %v2127
    %2360 = vmatprep.subr.bf16.mxu0 %v2132
    %2361 = vmatpush1.bf16.msra.mxu0 %v2131
    %2362 = vmatprep.subr.bf16.mxu0 %v2136
    %2363 = vmatpush1.bf16.msra.mxu0 %v2135
    %2364 = vmatprep.subr.bf16.mxu0 %v2140
    %2365 = vmatpush1.bf16.msra.mxu0 %v2139
    %2366 = vmatprep.subr.bf16.mxu0 %v2144
    %2367 = vmatpush1.bf16.msra.mxu0 %v2143
    %2368 = vmatprep.subr.bf16.mxu0 %v2148
    %2369 = vmatpush1.bf16.msra.mxu0 %v2147
    %2370 = vmatprep.subr.bf16.mxu0 %v2152
    %2371 = vmatpush1.bf16.msra.mxu0 %v2151
    %2372 = vmatprep.subr.bf16.mxu0 %v2156
    %2373 = vmatpush1.bf16.msra.mxu0 %v2155
    %2374 = vmatprep.subr.bf16.mxu0 %v2160
    %2375 = vmatpush1.bf16.msra.mxu0 %v2159
    %2376 = vmatprep.subr.bf16.mxu0 %v2164
    %2377 = vmatpush1.bf16.msra.mxu0 %v2163
    %2378 = vmatprep.subr.bf16.mxu0 %v2168
    %2379 = vmatpush1.bf16.msra.mxu0 %v2167
    %2380 = vmatprep.subr.bf16.mxu0 %v2172
    %2381 = vmatpush1.bf16.msra.mxu0 %v2171
    %2382 = vmatprep.subr.bf16.mxu0 %v2176
    %2383 = vmatpush1.bf16.msra.mxu0 %v2175
    %2384 = vmatprep.subr.bf16.mxu0 %v2180
    %2385 = vmatpush1.bf16.msra.mxu0 %v2179
    %2386 = vmatprep.subr.bf16.mxu0 %v2184
    %2387 = vmatpush1.bf16.msra.mxu0 %v2183
    %2388 = vmatprep.mubr.bf16.mxu0 %v1523
    %2389 = vmatmul.mubr.bf16.gmra.mrb[0].mxu0 %v1522
    %v2390 = vpop.f32.mrb[0].mxu0
    %v2391 = vadd.f32 %v2350, %v2390
    %v2392 = vpop.f32.mrb[0].mxu0
    %v2393 = vadd.f32 %v2352, %v2392
    %v2394 = vpop.f32.mrb[0].mxu0
    %v2395 = vpop.f32.mrb[0].mxu0
    %2396 = vdwg.mxu0
    %2397 = vmatprep.subr.bf16.mxu0 %v2062
    %2398 = vmatpush1.bf16.msra.mxu0 %v2061
    %2399 = vmatprep.subr.bf16.mxu0 %v2066
    %2400 = vmatpush1.bf16.msra.mxu0 %v2065
    %2401 = vmatprep.subr.bf16.mxu0 %v2070
    %2402 = vmatpush1.bf16.msra.mxu0 %v2069
    %2403 = vmatprep.subr.bf16.mxu0 %v2074
    %2404 = vmatpush1.bf16.msra.mxu0 %v2073
    %2405 = vmatprep.subr.bf16.mxu0 %v2078
    %2406 = vmatpush1.bf16.msra.mxu0 %v2077
    %2407 = vmatprep.subr.bf16.mxu0 %v2082
    %2408 = vmatpush1.bf16.msra.mxu0 %v2081
    %2409 = vmatprep.subr.bf16.mxu0 %v2086
    %2410 = vmatpush1.bf16.msra.mxu0 %v2085
    %2411 = vmatprep.subr.bf16.mxu0 %v2090
    %2412 = vmatpush1.bf16.msra.mxu0 %v2089
    %2413 = vmatprep.subr.bf16.mxu0 %v2094
    %2414 = vmatpush1.bf16.msra.mxu0 %v2093
    %2415 = vmatprep.subr.bf16.mxu0 %v2098
    %2416 = vmatpush1.bf16.msra.mxu0 %v2097
    %2417 = vmatprep.subr.bf16.mxu0 %v2102
    %2418 = vmatpush1.bf16.msra.mxu0 %v2101
    %2419 = vmatprep.subr.bf16.mxu0 %v2106
    %2420 = vmatpush1.bf16.msra.mxu0 %v2105
    %2421 = vmatprep.subr.bf16.mxu0 %v2110
    %2422 = vmatpush1.bf16.msra.mxu0 %v2109
    %2423 = vmatprep.subr.bf16.mxu0 %v2114
    %2424 = vmatpush1.bf16.msra.mxu0 %v2113
    %2425 = vmatprep.subr.bf16.mxu0 %v2118
    %2426 = vmatpush1.bf16.msra.mxu0 %v2117
    %2427 = vmatprep.subr.bf16.mxu0 %v2122
    %2428 = vmatpush1.bf16.msra.mxu0 %v2121
    %2429 = vmatprep.mubr.bf16.mxu0 %v1521
    %2430 = vmatmul.mubr.bf16.gmra.mrb[0].mxu0 %v1520
    %v2431 = vpop.f32.mrb[0].mxu0
    %v2432 = vadd.f32 %v1666, %v2431
    %v2433 = vpop.f32.mrb[0].mxu0
    %v2434 = vadd.f32 %v1670, %v2433
    %v2435 = vpop.f32.mrb[0].mxu0
    %v2436 = vpop.f32.mrb[0].mxu0
    %2437 = vdwg.mxu0
    %2438 = vmatprep.subr.bf16.mxu0 %v2126
    %2439 = vmatpush1.bf16.msra.mxu0 %v2125
    %2440 = vmatprep.subr.bf16.mxu0 %v2130
    %2441 = vmatpush1.bf16.msra.mxu0 %v2129
    %2442 = vmatprep.subr.bf16.mxu0 %v2134
    %2443 = vmatpush1.bf16.msra.mxu0 %v2133
    %2444 = vmatprep.subr.bf16.mxu0 %v2138
    %2445 = vmatpush1.bf16.msra.mxu0 %v2137
    %2446 = vmatprep.subr.bf16.mxu0 %v2142
    %2447 = vmatpush1.bf16.msra.mxu0 %v2141
    %2448 = vmatprep.subr.bf16.mxu0 %v2146
    %2449 = vmatpush1.bf16.msra.mxu0 %v2145
    %2450 = vmatprep.subr.bf16.mxu0 %v2150
    %2451 = vmatpush1.bf16.msra.mxu0 %v2149
    %2452 = vmatprep.subr.bf16.mxu0 %v2154
    %2453 = vmatpush1.bf16.msra.mxu0 %v2153
    %2454 = vmatprep.subr.bf16.mxu0 %v2158
    %2455 = vmatpush1.bf16.msra.mxu0 %v2157
    %2456 = vmatprep.subr.bf16.mxu0 %v2162
    %2457 = vmatpush1.bf16.msra.mxu0 %v2161
    %2458 = vmatprep.subr.bf16.mxu0 %v2166
    %2459 = vmatpush1.bf16.msra.mxu0 %v2165
    %2460 = vmatprep.subr.bf16.mxu0 %v2170
    %2461 = vmatpush1.bf16.msra.mxu0 %v2169
    %2462 = vmatprep.subr.bf16.mxu0 %v2174
    %2463 = vmatpush1.bf16.msra.mxu0 %v2173
    %2464 = vmatprep.subr.bf16.mxu0 %v2178
    %2465 = vmatpush1.bf16.msra.mxu0 %v2177
    %2466 = vmatprep.subr.bf16.mxu0 %v2182
    %2467 = vmatpush1.bf16.msra.mxu0 %v2181
    %2468 = vmatprep.subr.bf16.mxu0 %v2186
    %2469 = vmatpush1.bf16.msra.mxu0 %v2185
    %2470 = vmatprep.mubr.bf16.mxu0 %v1523
    %2471 = vmatmul.mubr.bf16.gmra.mrb[0].mxu0 %v1522
    %v2472 = vpop.f32.mrb[0].mxu0
    %v2473 = vadd.f32 %v2432, %v2472
    %v2474 = vpop.f32.mrb[0].mxu0
    %v2475 = vadd.f32 %v2434, %v2474
    %v2476 = vpop.f32.mrb[0].mxu0
    %v2477 = vpop.f32.mrb[0].mxu0
    %2478 = vdwg.mxu0
    %v2479 = vmax.f32 %v2391, 0.0
    %v2480 = vmax.f32 %v2393, 0.0
    %v2481 = vmax.f32 %v2473, 0.0
    %v2482 = vmax.f32 %v2475, 0.0
    %v2483 = vld [vmem:[%s4] sm:$0xf]
    %v2484 = vld [vmem:[#allocation7 + $0x2] sm:$0x1]
    %2486 = vset.pattern.permute.xlu0 0
    %2487 = vperm.xlu0 %2486, %v2484
    %v2488 = vpop.permute.xlu0 %2487
    %v2491 = vunpack.c.l.s4 839922192
    %v2492 = vunpack.c.0.s8 %v2491
    %v2493 = vlaneseq
    %v2494 = vshrl.u32 %v2493, 7
    %v2495 = vsub.s32 %v2492, %v2494
    %v2496 = vrot.slane %v2488, %v2495
    %v2498 = vlaneseq
    %v2499 = vshrl.u32 %v2498, 7
    %v2500 = vsub.s32 0, %v2499
    %v2501 = vrot.slane %v2483, %v2500
    %v2502 = vlaneseq
    %v2503 = vshrl.u32 %v2502, 7
    %v2504 = vsub.s32 1, %v2503
    %v2505 = vrot.slane %v2483, %v2504
    %v2506 = vlaneseq
    %v2507 = vshrl.u32 %v2506, 7
    %v2508 = vsub.s32 2, %v2507
    %v2509 = vrot.slane %v2483, %v2508
    %v2510 = vlaneseq
    %v2511 = vshrl.u32 %v2510, 7
    %v2512 = vsub.s32 3, %v2511
    %v2513 = vrot.slane %v2483, %v2512
    %2518 = vmatprep.subr.mxu0 %v2480
    %2519 = vmatpush1.xpose.msra.mxu0 %v2479
    %2520 = vmatprep.subr.mxu0 0.0
    %2521 = vmatpush1.xpose.msra.mxu0 0.0
    %2522 = vmatprep.subr.mxu0 0.0
    %2523 = vmatpush1.xpose.msra.mxu0 0.0
    %2524 = vmatprep.subr.mxu0 0.0
    %2525 = vmatpush1.xpose.msra.mxu0 0.0
    %2526 = vmatprep.subr.mxu0 0.0
    %2527 = vmatpush1.xpose.msra.mxu0 0.0
    %2528 = vmatprep.subr.mxu0 0.0
    %2529 = vmatpush1.xpose.msra.mxu0 0.0
    %2530 = vmatprep.subr.mxu0 0.0
    %2531 = vmatpush1.xpose.msra.mxu0 0.0
    %2532 = vmatprep.subr.mxu0 0.0
    %2533 = vmatpush1.xpose.msra.mxu0 0.0
    %2534 = vmatprep.subr.mxu0 0.0
    %2535 = vmatpush1.xpose.msra.mxu0 0.0
    %2536 = vmatprep.subr.mxu0 0.0
    %2537 = vmatpush1.xpose.msra.mxu0 0.0
    %2538 = vmatprep.subr.mxu0 0.0
    %2539 = vmatpush1.xpose.msra.mxu0 0.0
    %2540 = vmatprep.subr.mxu0 0.0
    %2541 = vmatpush1.xpose.msra.mxu0 0.0
    %2542 = vmatprep.subr.mxu0 0.0
    %2543 = vmatpush1.xpose.msra.mxu0 0.0
    %2544 = vmatprep.subr.mxu0 0.0
    %2545 = vmatpush1.xpose.msra.mxu0 0.0
    %2546 = vmatprep.subr.mxu0 0.0
    %2547 = vmatpush1.xpose.msra.mxu0 0.0
    %2548 = vmatprep.subr.mxu0 0.0
    %2549 = vmatpush1.xpose.msra.mxu0 0.0
    %2550 = vmatprep.subr.mxu0 0.0
    %2551 = vmatpush1.xpose.msra.mxu0 0.0
    %2552 = vmatprep.subr.mxu0 0.0
    %2553 = vmatpush1.xpose.msra.mxu0 0.0
    %2554 = vmatprep.subr.mxu0 0.0
    %2555 = vmatpush1.xpose.msra.mxu0 0.0
    %2556 = vmatprep.subr.mxu0 0.0
    %2557 = vmatpush1.xpose.msra.mxu0 0.0
    %2558 = vmatprep.subr.mxu0 0.0
    %2559 = vmatpush1.xpose.msra.mxu0 0.0
    %2560 = vmatprep.subr.mxu0 0.0
    %2561 = vmatpush1.xpose.msra.mxu0 0.0
    %2562 = vmatprep.subr.mxu0 0.0
    %2563 = vmatpush1.xpose.msra.mxu0 0.0
    %2564 = vmatprep.subr.mxu0 0.0
    %2565 = vmatpush1.xpose.msra.mxu0 0.0
    %2566 = vmatprep.subr.mxu0 0.0
    %2567 = vmatpush1.xpose.msra.mxu0 0.0
    %2568 = vmatprep.subr.mxu0 0.0
    %2569 = vmatpush1.xpose.msra.mxu0 0.0
    %2570 = vmatprep.subr.mxu0 0.0
    %2571 = vmatpush1.xpose.msra.mxu0 0.0
    %2572 = vmatprep.subr.mxu0 0.0
    %2573 = vmatpush1.xpose.msra.mxu0 0.0
    %2574 = vmatprep.subr.mxu0 0.0
    %2575 = vmatpush1.xpose.msra.mxu0 0.0
    %2576 = vmatprep.subr.mxu0 0.0
    %2577 = vmatpush1.xpose.msra.mxu0 0.0
    %2578 = vmatprep.subr.mxu0 0.0
    %2579 = vmatpush1.xpose.msra.mxu0 0.0
    %2580 = vmatprep.subr.mxu0 0.0
    %2581 = vmatpush1.xpose.msra.mxu0 0.0
    %2582 = vmatprep.mubr.f32.mxu0 %v2505
    %2583 = vmatmul.mubr.f32.gmra.mrb[0].mxu0 %v2501
    %v2584 = vpop.f32.mrb[0].mxu0
    %v2585 = vadd.f32 %v2496, %v2584
    %v2586 = vpop.f32.mrb[0].mxu0
    %2587 = vdwg.mxu0
    %2588 = vmatprep.subr.mxu0 %v2482
    %2589 = vmatpush1.xpose.msra.mxu0 %v2481
    %2590 = vmatprep.subr.mxu0 0.0
    %2591 = vmatpush1.xpose.msra.mxu0 0.0
    %2592 = vmatprep.subr.mxu0 0.0
    %2593 = vmatpush1.xpose.msra.mxu0 0.0
    %2594 = vmatprep.subr.mxu0 0.0
    %2595 = vmatpush1.xpose.msra.mxu0 0.0
    %2596 = vmatprep.subr.mxu0 0.0
    %2597 = vmatpush1.xpose.msra.mxu0 0.0
    %2598 = vmatprep.subr.mxu0 0.0
    %2599 = vmatpush1.xpose.msra.mxu0 0.0
    %2600 = vmatprep.subr.mxu0 0.0
    %2601 = vmatpush1.xpose.msra.mxu0 0.0
    %2602 = vmatprep.subr.mxu0 0.0
    %2603 = vmatpush1.xpose.msra.mxu0 0.0
    %2604 = vmatprep.subr.mxu0 0.0
    %2605 = vmatpush1.xpose.msra.mxu0 0.0
    %2606 = vmatprep.subr.mxu0 0.0
    %2607 = vmatpush1.xpose.msra.mxu0 0.0
    %2608 = vmatprep.subr.mxu0 0.0
    %2609 = vmatpush1.xpose.msra.mxu0 0.0
    %2610 = vmatprep.subr.mxu0 0.0
    %2611 = vmatpush1.xpose.msra.mxu0 0.0
    %2612 = vmatprep.subr.mxu0 0.0
    %2613 = vmatpush1.xpose.msra.mxu0 0.0
    %2614 = vmatprep.subr.mxu0 0.0
    %2615 = vmatpush1.xpose.msra.mxu0 0.0
    %2616 = vmatprep.subr.mxu0 0.0
    %2617 = vmatpush1.xpose.msra.mxu0 0.0
    %2618 = vmatprep.subr.mxu0 0.0
    %2619 = vmatpush1.xpose.msra.mxu0 0.0
    %2620 = vmatprep.subr.mxu0 0.0
    %2621 = vmatpush1.xpose.msra.mxu0 0.0
    %2622 = vmatprep.subr.mxu0 0.0
    %2623 = vmatpush1.xpose.msra.mxu0 0.0
    %2624 = vmatprep.subr.mxu0 0.0
    %2625 = vmatpush1.xpose.msra.mxu0 0.0
    %2626 = vmatprep.subr.mxu0 0.0
    %2627 = vmatpush1.xpose.msra.mxu0 0.0
    %2628 = vmatprep.subr.mxu0 0.0
    %2629 = vmatpush1.xpose.msra.mxu0 0.0
    %2630 = vmatprep.subr.mxu0 0.0
    %2631 = vmatpush1.xpose.msra.mxu0 0.0
    %2632 = vmatprep.subr.mxu0 0.0
    %2633 = vmatpush1.xpose.msra.mxu0 0.0
    %2634 = vmatprep.subr.mxu0 0.0
    %2635 = vmatpush1.xpose.msra.mxu0 0.0
    %2636 = vmatprep.subr.mxu0 0.0
    %2637 = vmatpush1.xpose.msra.mxu0 0.0
    %2638 = vmatprep.subr.mxu0 0.0
    %2639 = vmatpush1.xpose.msra.mxu0 0.0
    %2640 = vmatprep.subr.mxu0 0.0
    %2641 = vmatpush1.xpose.msra.mxu0 0.0
    %2642 = vmatprep.subr.mxu0 0.0
    %2643 = vmatpush1.xpose.msra.mxu0 0.0
    %2644 = vmatprep.subr.mxu0 0.0
    %2645 = vmatpush1.xpose.msra.mxu0 0.0
    %2646 = vmatprep.subr.mxu0 0.0
    %2647 = vmatpush1.xpose.msra.mxu0 0.0
    %2648 = vmatprep.subr.mxu0 0.0
    %2649 = vmatpush1.xpose.msra.mxu0 0.0
    %2650 = vmatprep.subr.mxu0 0.0
    %2651 = vmatpush1.xpose.msra.mxu0 0.0
    %2652 = vmatprep.mubr.f32.mxu0 %v2513
    %2653 = vmatmul.mubr.f32.gmra.mrb[0].mxu0 %v2509
    %v2654 = vpop.f32.mrb[0].mxu0
    %v2655 = vadd.f32 %v2585, %v2654
    %v2656 = vpop.f32.mrb[0].mxu0
    %2657 = vdwg.mxu0
    %vm2658 = vcmask 57344
    %2659 = vst.msk [vmem:[#allocation10] sm:$0x1] %vm2658, %v2655
    // Predicated region
    $region38: #{tpu_custom_call.1} parent=1 // pred_check
      _
    $region39: #{tpu_custom_call.1} parent=1 // pred_check_branch
      %2661 = sbr.rel (0) target = $region41
    $region40: #{tpu_custom_call.1} parent=1 // pred_region
      %s2663 = ssub.s32 16, 16
      %2664 = vsyncadd [#allocation4], %s2663
      %s2666 = sshll.u32 [#allocation10], 4
      %s2667 = int_to_ptr.vmem [resolvable:$true] %s2666
      %2669 = dma.vmem_to_hbm [thread:$0]  %s2667, 16, %s5, [#allocation4]
    $region41: #{tpu_custom_call.1} parent=1 // pred_fallthru
      _
    // Predicated region
    $region42: #{tpu_custom_call.1} parent=1 // pred_check
      _
    $region43: #{tpu_custom_call.1} parent=1 // pred_check_branch
      %2671 = sbr.rel (0) target = $region45
    $region44: #{tpu_custom_call.1} parent=1 // pred_region
      %2672 = dma.done [#allocation4], 16
    $region45: #{tpu_custom_call.1} parent=1 // pred_fallthru
      _
    %2673 = vsyncpa [#allocation3], 1
    %2674 = vsyncpa [#allocation6], 1
    %2675 = vsyncpa [#allocation9], 1
    %2676 = vsyncpa [#allocation4], 1

</llo_original>
